<compile_context>
chip_gen: v5e
topology: v5e:2x2
jax: 0.10.0
libtpu: 0.0.40
codegen_flags: <defaults>
</compile_context>

<pallas_src>
import numpy as np
import jax
import jax.numpy as jnp
from jax.experimental import pallas as pl
from jax.experimental.pallas import tpu as pltpu

# ----------------------------- config ---------------------------------------
B = 2                          # batch
C_IN = 4                       # image channels
IMG = 16                       # image H = W
PATCH = 4                      # patch size for the (synthetic) image encoder
GRID = IMG // PATCH            # 4  -> low-res mask side
N_PATCH = GRID * GRID          # 16 image tokens
PATCH_DIM = C_IN * PATCH * PATCH   # 64
D = 32                         # real embedding dim
MLP_HID = 64                   # real encoder MLP hidden
N_POINTS = 2
N_SPARSE = N_POINTS + 2        # 2 point tokens + 2 box-corner tokens
N_TOK = 2 + N_SPARSE           # iou token + mask token + sparse tokens = 6
NTOKP = 8                      # token rows padded to 8 (sublane-tile aligned)

DP = 128                       # padded (lane-dense) feature width
N_PIX = IMG * IMG              # 256 = lane-dense flattened output mask width

_INV_SQRT_D = 1.0 / float(np.sqrt(D))

# constant-slab row layout (all segment starts are multiples of 8)
R_BIAS = 0                     # 8 rows : [bp, b1, b2, bm1, bm2, bi1, bi2, nomask]
R_KB = 8                       # 32 rows: pe @ wk (k-bias), tiled over batch
R_TOK = 40                     # 16 rows: token base (iou/mask tokens at rows 0,1)
CS_ROWS = 56


# ------------------- bilinear upsample matrix (host constants) ---------------
def _bilinear_matrix(in_size, out_size):
    # PyTorch F.interpolate(mode='bilinear', align_corners=False) weights.
    A = np.zeros((out_size, in_size), dtype=np.float32)
    scale = in_size / out_size
    for i in range(out_size):
        src = max((i + 0.5) * scale - 0.5, 0.0)
        i0 = min(int(np.floor(src)), in_size - 1)
        i1 = min(i0 + 1, in_size - 1)
        frac = src - i0
        A[i, i0] += 1.0 - frac
        A[i, i1] += frac
    return A


_A_UP = _bilinear_matrix(GRID, IMG)                           # (IMG, GRID)
# out = A @ M @ A^T  <=>  out_flat = kron(A, A) @ m_flat   -> pass transpose so the
# kernel does (B, N_PATCH) @ (N_PATCH, IMG*IMG), a single lane-dense matmul.
_W_UP_T = np.kron(_A_UP, _A_UP).T.astype(np.float32)          # (N_PATCH, IMG*IMG)


# ----------------------------- the fused Pallas kernel -----------------------
def crohn_sam_kernel(x_ref, tok_ref, cs_ref, wsq_ref, wwide_ref, mask_ref, iou_ref):
    f32, bf16 = jnp.float32, jnp.bfloat16

    # ---- constants (pre-padded / pre-folded in prepare_constants) ----
    bias = cs_ref[R_BIAS:R_BIAS + 8, :]                     # (8, DP) f32
    bp, b1, b2 = bias[0:1], bias[1:2], bias[2:3]
    bm1, bm2 = bias[3:4], bias[4:5]
    bi1, bi2 = bias[5:6], bias[6:7]
    nomask = bias[7:8]
    kbias = cs_ref[R_KB:R_KB + B * N_PATCH, :]              # (32, DP) f32 : pe @ wk
    tokbase = cs_ref[R_TOK:R_TOK + B * NTOKP, :]            # (16, DP) f32

    wp = wsq_ref[0, :PATCH_DIM, :]                          # (64, DP) bf16
    w1, w2 = wsq_ref[1], wsq_ref[2]
    wq, wo = wsq_ref[3], wsq_ref[4]                         # wq pre-scaled by 1/sqrt(D)
    wm1, wm2 = wsq_ref[5], wsq_ref[6]
    wi1, wi2 = wsq_ref[7], wsq_ref[8]
    wkv = wwide_ref[0]                                      # (DP, 2*DP) bf16 : [wk | wv]
    wt = wwide_ref[1, :N_PATCH, :]                          # (16, N_PIX) bf16 : upsample

    # ---- image encoder: patch embed + masked LayerNorm + residual MLP ----
    h = jnp.dot(x_ref[...], wp, preferred_element_type=f32) + bp          # (32, DP)
    lane = jax.lax.broadcasted_iota(jnp.int32, h.shape, 1)
    feat = lane < D
    mu = jnp.sum(h, axis=-1, keepdims=True) * (1.0 / D)
    cen = jnp.where(feat, h - mu, 0.0)                      # padded lanes stay exactly 0
    var = jnp.sum(cen * cen, axis=-1, keepdims=True) * (1.0 / D)
    hn = (cen * jax.lax.rsqrt(var + 1e-6)).astype(bf16)
    m = jnp.maximum(jnp.dot(hn, w1, preferred_element_type=f32) + b1, 0.0)
    emb = h + jnp.dot(m.astype(bf16), w2, preferred_element_type=f32) + b2

    # ---- mask decoder ----
    src = emb + nomask                                      # + dense (no-mask) prompt
    tok = tokbase + tok_ref[...]                            # (B*NTOKP, DP) f32

    # packed k,v projection: one 256-lane MXU pass; pe@wk pre-folded into kbias
    kv = jnp.dot(src.astype(bf16), wkv, preferred_element_type=f32)       # (32, 2*DP)
    k3 = (kv[:, :DP] + kbias).reshape(B, N_PATCH, DP).astype(bf16)
    v3 = kv[:, DP:].reshape(B, N_PATCH, DP).astype(bf16)
    q3 = jnp.dot(tok.astype(bf16), wq,
                 preferred_element_type=f32).reshape(B, NTOKP, DP).astype(bf16)

    # batched cross attention (prompt tokens attend to image tokens)
    s = jnp.einsum('bqd,bkd->bqk', q3, k3, preferred_element_type=f32)    # (B, 8, 16)
    s = s - jnp.max(s, axis=-1, keepdims=True)
    p = jnp.exp(s)
    p = p * pl.reciprocal(jnp.sum(p, axis=-1, keepdims=True), approx=True)
    att = jnp.einsum('bqk,bkd->bqd', p.astype(bf16), v3,
                     preferred_element_type=f32)                          # (B, 8, DP)
    tok2 = tok + jnp.dot(att.reshape(B * NTOKP, DP).astype(bf16), wo,
                         preferred_element_type=f32)
    tok2_b = tok2.astype(bf16)

    # hypernetwork mask head (applied to all 8-aligned token rows; row 1 = mask token)
    hyp = jnp.maximum(jnp.dot(tok2_b, wm1, preferred_element_type=f32) + bm1, 0.0)
    hyp = jnp.dot(hyp.astype(bf16), wm2, preferred_element_type=f32) + bm2
    hyp3 = hyp.reshape(B, NTOKP, DP).astype(bf16)
    src3 = src.reshape(B, N_PATCH, DP).astype(bf16)
    low_all = jnp.einsum('bqd,bkd->bqk', hyp3, src3,
                         preferred_element_type=f32)                      # (B, 8, 16)
    low = low_all[:, 1, :]                                                # (B, 16)

    # fused bilinear F.interpolate(align_corners=False): one (B,16)@(16,256) matmul
    mask_ref[...] = jnp.dot(low.astype(bf16), wt, preferred_element_type=f32)

    # IoU head (row 0 = iou token; only lane 0 of the output is meaningful)
    hi = jnp.maximum(jnp.dot(tok2_b, wi1, preferred_element_type=f32) + bi1, 0.0)
    iou_all = jnp.dot(hi.astype(bf16), wi2, preferred_element_type=f32) + bi2
    iou_ref[...] = iou_all.reshape(B, NTOKP, DP)[:, 0, :]                 # (B, DP)


def _fused_pallas_call(x, tok_sparse, cslab, wstack, wwide):
    vmem = lambda: pl.BlockSpec(memory_space=pltpu.MemorySpace.VMEM)
    return pl.pallas_call(
        crohn_sam_kernel,
        out_shape=(jax.ShapeDtypeStruct((B, N_PIX), jnp.float32),
                   jax.ShapeDtypeStruct((B, DP), jnp.float32)),
        in_specs=[vmem(), vmem(), vmem(), vmem(), vmem()],
        out_specs=(vmem(), vmem()),
    )(x, tok_sparse, cslab, wstack, wwide)


# ---------------------- positional encoding helpers --------------------------
def positional_encoding(coords01, gauss):
    c = 2.0 * coords01 - 1.0
    proj = 2.0 * jnp.pi * (c @ gauss)               # (..., D//2)
    return jnp.concatenate([jnp.sin(proj), jnp.cos(proj)], axis=-1)


def get_dense_pe(gauss):
    ys = (jnp.arange(GRID, dtype=jnp.float32) + 0.5) / GRID
    xs = (jnp.arange(GRID, dtype=jnp.float32) + 0.5) / GRID
    gy, gx = jnp.meshgrid(ys, xs, indexing="ij")
    coords = jnp.stack([gx, gy], axis=-1).reshape(N_PATCH, 2)
    return positional_encoding(coords, gauss)                 # (N_PATCH, D)


# ----------------------------- parameters ------------------------------------
def init_params(key):
    ks = jax.random.split(key, 24)
    n = lambda k, shape, s=0.1: (s * jax.random.normal(k, shape)).astype(jnp.float32)
    enc = dict(
        wp=n(ks[0], (PATCH_DIM, D)), bp=n(ks[1], (1, D)),
        w1=n(ks[2], (D, MLP_HID)), b1=n(ks[3], (1, MLP_HID)),
        w2=n(ks[4], (MLP_HID, D)), b2=n(ks[5], (1, D)),
    )
    prompt = dict(
        pe_gauss=n(ks[6], (2, D // 2), 1.0),
        label_emb=n(ks[7], (2, D)),
        corner_emb=n(ks[8], (2, D)),
        no_mask_emb=n(ks[9], (D,)),
    )
    dec = dict(
        iou_token=n(ks[10], (D,)), mask_token=n(ks[11], (D,)),
        wq=n(ks[12], (D, D)), wk=n(ks[13], (D, D)),
        wv=n(ks[14], (D, D)), wo=n(ks[15], (D, D)),
        wm1=n(ks[16], (D, D)), bm1=n(ks[17], (1, D)),
        wm2=n(ks[18], (D, D)), bm2=n(ks[19], (1, D)),
        wi1=n(ks[20], (D, D)), bi1=n(ks[21], (1, D)),
        wi2=n(ks[22], (D, 1)), bi2=jnp.zeros((1, 1), jnp.float32),
    )
    return dict(enc=enc, prompt=prompt, dec=dec)


# ------------------- one-time constant preparation (hoisted) -----------------
def _pad_last(a, cols=DP):
    a = jnp.asarray(a, jnp.float32)
    return jnp.pad(a, [(0, 0)] * (a.ndim - 1) + [(0, cols - a.shape[-1])])


def _pad2(a, rows=DP, cols=DP):
    a = jnp.asarray(a, jnp.float32)
    return jnp.pad(a, ((0, rows - a.shape[0]), (0, cols - a.shape[1])))


def prepare_constants(params):
    """Pad / stack / fold every input-independent tensor exactly once."""
    enc, pr, dec = params["enc"], params["prompt"], params["dec"]

    # bf16 square-weight stack: [wp, w1, w2, wq*scale, wo, wm1, wm2, wi1, wi2]
    wstack = jnp.stack([
        _pad2(enc["wp"]), _pad2(enc["w1"]), _pad2(enc["w2"]),
        _pad2(dec["wq"] * _INV_SQRT_D), _pad2(dec["wo"]),
        _pad2(dec["wm1"]), _pad2(dec["wm2"]),
        _pad2(dec["wi1"]), _pad2(dec["wi2"]),
    ], axis=0).astype(jnp.bfloat16)                                   # (9, DP, DP)

    # bf16 wide stack: packed [wk | wv] projection + bilinear upsample matrix
    wkv = jnp.concatenate([_pad2(dec["wk"]), _pad2(dec["wv"])], axis=1)   # (DP, 2*DP)
    wt = _pad2(jnp.asarray(_W_UP_T), DP, N_PIX)                            # (DP, 256)
    wwide = jnp.stack([wkv, wt], axis=0).astype(jnp.bfloat16)              # (2, DP, 256)

    # f32 constant slab
    bias = jnp.concatenate([
        _pad_last(enc["bp"]), _pad_last(enc["b1"]), _pad_last(enc["b2"]),
        _pad_last(dec["bm1"]), _pad_last(dec["bm2"]),
        _pad_last(dec["bi1"]), _pad_last(dec["bi2"]),
        _pad_last(pr["no_mask_emb"][None, :]),
    ], axis=0)                                                             # (8, DP)

    pe = get_dense_pe(pr["pe_gauss"])                                      # (16, D)
    kbias = jnp.tile(_pad_last(pe @ dec["wk"]), (B, 1))                    # (32, DP)

    tok_one = jnp.zeros((NTOKP, D), jnp.float32)
    tok_one = tok_one.at[0].set(dec["iou_token"]).at[1].set(dec["mask_token"])
    tokbase = jnp.tile(_pad_last(tok_one), (B, 1))                         # (16, DP)

    cs = jnp.zeros((CS_ROWS, DP), jnp.float32)
    cs = cs.at[R_BIAS:R_BIAS + 8].set(bias)
    cs = cs.at[R_KB:R_KB + B * N_PATCH].set(kbias)
    cs = cs.at[R_TOK:R_TOK + B * NTOKP].set(tokbase)

    return dict(
        cslab=cs, wstack=wstack, wwide=wwide,
        pe_gauss=jnp.asarray(pr["pe_gauss"], jnp.float32),
        label_emb=jnp.asarray(pr["label_emb"], jnp.float32),
        corner_emb=jnp.asarray(pr["corner_emb"], jnp.float32),
    )


# ----------------------------- CrohnSAM forward ------------------------------
@jax.jit
def crohn_sam_forward(consts, image, point, point_label, box):
    # ---- image patches (only the two input-dependent tensors are built here) ----
    x = image.reshape(B, C_IN, GRID, PATCH, GRID, PATCH)
    x = x.transpose(0, 2, 4, 1, 3, 5).reshape(B * N_PATCH, PATCH_DIM)
    x = x.astype(jnp.bfloat16)

    # ---- prompt encoder (torch.no_grad in the reference; point & box prompts on) ----
    # TODO(synk): the sin/cos Fourier prompt positional encoding stays in plain JAX
    # (single fused wrapper op-chain) rather than inside the Mosaic kernel.
    coords = jnp.concatenate([point, box.reshape(B, 2, 2)], axis=1) / IMG   # (B, 4, 2)
    c = 2.0 * coords - 1.0
    proj = 2.0 * jnp.pi * (c @ consts["pe_gauss"])                          # (B, 4, D/2)
    pe_sp = jnp.concatenate([jnp.sin(proj), jnp.cos(proj)], axis=-1)        # (B, 4, D)
    add = jnp.concatenate(
        [consts["label_emb"][point_label],
         jnp.broadcast_to(consts["corner_emb"][None], (B, 2, D))], axis=1)  # (B, 4, D)
    sparse = jax.lax.stop_gradient(pe_sp + add)                             # (B, 4, D)
    # scatter sparse tokens to rows 2..5 of each 8-row block, pad features to 128 lanes
    tok_sparse = jnp.pad(sparse, ((0, 0), (2, NTOKP - 2 - N_SPARSE), (0, DP - D)))
    tok_sparse = tok_sparse.reshape(B * NTOKP, DP)                          # (16, DP)

    masks_flat, iou_pad = _fused_pallas_call(
        x, tok_sparse, consts["cslab"], consts["wstack"], consts["wwide"])

    ori_res_masks = masks_flat.reshape(B, 1, IMG, IMG)   # F.interpolate output
    predict_iou = iou_pad[:, :1]                         # (B, 1)
    return ori_res_masks, predict_iou


# ----------------------------- main -------------------------------------------
if __name__ == "__main__":
    key = jax.random.PRNGKey(0)
    k_img, k_pt, k_lbl, k_box, k_par = jax.random.split(key, 5)

    image = jax.random.normal(k_img, (B, C_IN, IMG, IMG), jnp.float32)
    point = jax.random.uniform(k_pt, (B, N_POINTS, 2), jnp.float32, 0.0, IMG)
    point_label = jax.random.randint(k_lbl, (B, N_POINTS), 0, 2)
    box = jax.random.uniform(k_box, (B, 4), jnp.float32, 0.0, IMG)

    params = init_params(k_par)
    consts = prepare_constants(params)   # one-time: all padding/stacking/folding

    ori_res_masks, predict_iou = crohn_sam_forward(
        consts, image, point, point_label, box)
    jax.block_until_ready((ori_res_masks, predict_iou))

    assert ori_res_masks.shape == (B, 1, IMG, IMG)
    assert predict_iou.shape == (B, 1)
    print("KERNEL_OK")
</pallas_src>

<mosaic_0001>
module attributes {stable_mosaic.version = 11 : i64} {
  func.func @crohn_sam_kernel(%arg0: memref<32x64xbf16, #tpu.memory_space<vmem>>, %arg1: memref<16x128xf32, #tpu.memory_space<vmem>>, %arg2: memref<56x128xf32, #tpu.memory_space<vmem>>, %arg3: memref<9x128x128xbf16, #tpu.memory_space<vmem>>, %arg4: memref<2x128x256xbf16, #tpu.memory_space<vmem>>, %arg5: memref<2x256xf32, #tpu.memory_space<vmem>>, %arg6: memref<2x128xf32, #tpu.memory_space<vmem>>) attributes {dimension_semantics = [], scalar_prefetch = 0 : i64, scratch_operands = 0 : i64, tpu.core_type = #tpu.core_type<tc>} {
    %c0 = arith.constant 0 : index
    %c0_0 = arith.constant 0 : index
    %0 = vector.load %arg2[%c0, %c0_0] : memref<56x128xf32, #tpu.memory_space<vmem>>, vector<8x128xf32>
    %1 = vector.extract_strided_slice %0 {offsets = [0, 0], sizes = [1, 128], strides = [1, 1]} : vector<8x128xf32> to vector<1x128xf32>
    %2 = vector.extract_strided_slice %0 {offsets = [1, 0], sizes = [1, 128], strides = [1, 1]} : vector<8x128xf32> to vector<1x128xf32>
    %3 = vector.extract_strided_slice %0 {offsets = [2, 0], sizes = [1, 128], strides = [1, 1]} : vector<8x128xf32> to vector<1x128xf32>
    %4 = vector.extract_strided_slice %0 {offsets = [3, 0], sizes = [1, 128], strides = [1, 1]} : vector<8x128xf32> to vector<1x128xf32>
    %5 = vector.extract_strided_slice %0 {offsets = [4, 0], sizes = [1, 128], strides = [1, 1]} : vector<8x128xf32> to vector<1x128xf32>
    %6 = vector.extract_strided_slice %0 {offsets = [5, 0], sizes = [1, 128], strides = [1, 1]} : vector<8x128xf32> to vector<1x128xf32>
    %7 = vector.extract_strided_slice %0 {offsets = [6, 0], sizes = [1, 128], strides = [1, 1]} : vector<8x128xf32> to vector<1x128xf32>
    %8 = vector.extract_strided_slice %0 {offsets = [7, 0], sizes = [1, 128], strides = [1, 1]} : vector<8x128xf32> to vector<1x128xf32>
    %c8 = arith.constant 8 : index
    %c0_1 = arith.constant 0 : index
    %9 = vector.load %arg2[%c8, %c0_1] : memref<56x128xf32, #tpu.memory_space<vmem>>, vector<32x128xf32>
    %c40 = arith.constant 40 : index
    %c0_2 = arith.constant 0 : index
    %10 = vector.load %arg2[%c40, %c0_2] : memref<56x128xf32, #tpu.memory_space<vmem>>, vector<16x128xf32>
    %c0_3 = arith.constant 0 : index
    %c0_4 = arith.constant 0 : index
    %c0_5 = arith.constant 0 : index
    %11 = vector.load %arg3[%c0_3, %c0_4, %c0_5] : memref<9x128x128xbf16, #tpu.memory_space<vmem>>, vector<1x64x128xbf16>
    %12 = vector.shape_cast %11 : vector<1x64x128xbf16> to vector<64x128xbf16>
    %c1 = arith.constant 1 : index
    %c0_6 = arith.constant 0 : index
    %c0_7 = arith.constant 0 : index
    %13 = vector.load %arg3[%c1, %c0_6, %c0_7] : memref<9x128x128xbf16, #tpu.memory_space<vmem>>, vector<1x128x128xbf16>
    %14 = vector.shape_cast %13 : vector<1x128x128xbf16> to vector<128x128xbf16>
    %c2 = arith.constant 2 : index
    %c0_8 = arith.constant 0 : index
    %c0_9 = arith.constant 0 : index
    %15 = vector.load %arg3[%c2, %c0_8, %c0_9] : memref<9x128x128xbf16, #tpu.memory_space<vmem>>, vector<1x128x128xbf16>
    %16 = vector.shape_cast %15 : vector<1x128x128xbf16> to vector<128x128xbf16>
    %c3 = arith.constant 3 : index
    %c0_10 = arith.constant 0 : index
    %c0_11 = arith.constant 0 : index
    %17 = vector.load %arg3[%c3, %c0_10, %c0_11] : memref<9x128x128xbf16, #tpu.memory_space<vmem>>, vector<1x128x128xbf16>
    %18 = vector.shape_cast %17 : vector<1x128x128xbf16> to vector<128x128xbf16>
    %c4 = arith.constant 4 : index
    %c0_12 = arith.constant 0 : index
    %c0_13 = arith.constant 0 : index
    %19 = vector.load %arg3[%c4, %c0_12, %c0_13] : memref<9x128x128xbf16, #tpu.memory_space<vmem>>, vector<1x128x128xbf16>
    %20 = vector.shape_cast %19 : vector<1x128x128xbf16> to vector<128x128xbf16>
    %c5 = arith.constant 5 : index
    %c0_14 = arith.constant 0 : index
    %c0_15 = arith.constant 0 : index
    %21 = vector.load %arg3[%c5, %c0_14, %c0_15] : memref<9x128x128xbf16, #tpu.memory_space<vmem>>, vector<1x128x128xbf16>
    %22 = vector.shape_cast %21 : vector<1x128x128xbf16> to vector<128x128xbf16>
    %c6 = arith.constant 6 : index
    %c0_16 = arith.constant 0 : index
    %c0_17 = arith.constant 0 : index
    %23 = vector.load %arg3[%c6, %c0_16, %c0_17] : memref<9x128x128xbf16, #tpu.memory_space<vmem>>, vector<1x128x128xbf16>
    %24 = vector.shape_cast %23 : vector<1x128x128xbf16> to vector<128x128xbf16>
    %c7 = arith.constant 7 : index
    %c0_18 = arith.constant 0 : index
    %c0_19 = arith.constant 0 : index
    %25 = vector.load %arg3[%c7, %c0_18, %c0_19] : memref<9x128x128xbf16, #tpu.memory_space<vmem>>, vector<1x128x128xbf16>
    %26 = vector.shape_cast %25 : vector<1x128x128xbf16> to vector<128x128xbf16>
    %c8_20 = arith.constant 8 : index
    %c0_21 = arith.constant 0 : index
    %c0_22 = arith.constant 0 : index
    %27 = vector.load %arg3[%c8_20, %c0_21, %c0_22] : memref<9x128x128xbf16, #tpu.memory_space<vmem>>, vector<1x128x128xbf16>
    %28 = vector.shape_cast %27 : vector<1x128x128xbf16> to vector<128x128xbf16>
    %c0_23 = arith.constant 0 : index
    %c0_24 = arith.constant 0 : index
    %c0_25 = arith.constant 0 : index
    %29 = vector.load %arg4[%c0_23, %c0_24, %c0_25] : memref<2x128x256xbf16, #tpu.memory_space<vmem>>, vector<1x128x256xbf16>
    %30 = vector.shape_cast %29 : vector<1x128x256xbf16> to vector<128x256xbf16>
    %c1_26 = arith.constant 1 : index
    %c0_27 = arith.constant 0 : index
    %c0_28 = arith.constant 0 : index
    %31 = vector.load %arg4[%c1_26, %c0_27, %c0_28] : memref<2x128x256xbf16, #tpu.memory_space<vmem>>, vector<1x16x256xbf16>
    %32 = vector.shape_cast %31 : vector<1x16x256xbf16> to vector<16x256xbf16>
    %c0_29 = arith.constant 0 : index
    %c0_30 = arith.constant 0 : index
    %33 = vector.load %arg0[%c0_29, %c0_30] : memref<32x64xbf16, #tpu.memory_space<vmem>>, vector<32x64xbf16>
    %cst = arith.constant dense<0.000000e+00> : vector<32x128xf32>
    %34 = tpu.matmul %33, %12, %cst {dimension_numbers = #tpu.dot_dimension_numbers<[1], [0], [0], [1], [0, 0, 1, 1], [], []>} : vector<32x64xbf16>, vector<64x128xbf16>, vector<32x128xf32> -> vector<32x128xf32>
    %35 = vector.broadcast %1 : vector<1x128xf32> to vector<32x128xf32>
    %36 = arith.addf %34, %35 : vector<32x128xf32>
    %37 = tpu.iota {dimensions = array<i32: 1>} : vector<32x128xi32>
    %c32_i32 = arith.constant 32 : i32
    %38 = vector.broadcast %c32_i32 : i32 to vector<32x128xi32>
    %39 = arith.cmpi slt, %37, %38 : vector<32x128xi32>
    %cst_31 = arith.constant dense<0.000000e+00> : vector<32xf32>
    %40 = vector.multi_reduction <add>, %36, %cst_31 [1] : vector<32x128xf32> to vector<32xf32>
    %41 = vector.shape_cast %40 : vector<32xf32> to vector<32x1xf32>
    %cst_32 = arith.constant 3.125000e-02 : f32
    %42 = vector.broadcast %cst_32 : f32 to vector<32x1xf32>
    %43 = arith.mulf %41, %42 : vector<32x1xf32>
    %44 = vector.broadcast %43 : vector<32x1xf32> to vector<32x128xf32>
    %45 = arith.subf %36, %44 : vector<32x128xf32>
    %cst_33 = arith.constant 0.000000e+00 : f32
    %46 = vector.broadcast %cst_33 : f32 to vector<32x128xf32>
    %47 = arith.select %39, %45, %46 : vector<32x128xi1>, vector<32x128xf32>
    %48 = arith.mulf %47, %47 : vector<32x128xf32>
    %cst_34 = arith.constant dense<0.000000e+00> : vector<32xf32>
    %49 = vector.multi_reduction <add>, %48, %cst_34 [1] : vector<32x128xf32> to vector<32xf32>
    %50 = vector.shape_cast %49 : vector<32xf32> to vector<32x1xf32>
    %cst_35 = arith.constant 3.125000e-02 : f32
    %51 = vector.broadcast %cst_35 : f32 to vector<32x1xf32>
    %52 = arith.mulf %50, %51 : vector<32x1xf32>
    %cst_36 = arith.constant 9.99999997E-7 : f32
    %53 = vector.broadcast %cst_36 : f32 to vector<32x1xf32>
    %54 = arith.addf %52, %53 : vector<32x1xf32>
    %55 = math.rsqrt %54 : vector<32x1xf32>
    %56 = vector.broadcast %55 : vector<32x1xf32> to vector<32x128xf32>
    %57 = arith.mulf %47, %56 : vector<32x128xf32>
    %58 = arith.truncf %57 : vector<32x128xf32> to vector<32x128xbf16>
    %cst_37 = arith.constant dense<0.000000e+00> : vector<32x128xf32>
    %59 = tpu.matmul %58, %14, %cst_37 {dimension_numbers = #tpu.dot_dimension_numbers<[1], [0], [0], [1], [0, 0, 1, 1], [], []>} : vector<32x128xbf16>, vector<128x128xbf16>, vector<32x128xf32> -> vector<32x128xf32>
    %60 = vector.broadcast %2 : vector<1x128xf32> to vector<32x128xf32>
    %61 = arith.addf %59, %60 : vector<32x128xf32>
    %cst_38 = arith.constant 0.000000e+00 : f32
    %62 = vector.broadcast %cst_38 : f32 to vector<32x128xf32>
    %63 = arith.maximumf %61, %62 : vector<32x128xf32>
    %64 = arith.truncf %63 : vector<32x128xf32> to vector<32x128xbf16>
    %cst_39 = arith.constant dense<0.000000e+00> : vector<32x128xf32>
    %65 = tpu.matmul %64, %16, %cst_39 {dimension_numbers = #tpu.dot_dimension_numbers<[1], [0], [0], [1], [0, 0, 1, 1], [], []>} : vector<32x128xbf16>, vector<128x128xbf16>, vector<32x128xf32> -> vector<32x128xf32>
    %66 = arith.addf %36, %65 : vector<32x128xf32>
    %67 = vector.broadcast %3 : vector<1x128xf32> to vector<32x128xf32>
    %68 = arith.addf %66, %67 : vector<32x128xf32>
    %69 = vector.broadcast %8 : vector<1x128xf32> to vector<32x128xf32>
    %70 = arith.addf %68, %69 : vector<32x128xf32>
    %c0_40 = arith.constant 0 : index
    %c0_41 = arith.constant 0 : index
    %71 = vector.load %arg1[%c0_40, %c0_41] : memref<16x128xf32, #tpu.memory_space<vmem>>, vector<16x128xf32>
    %72 = arith.addf %10, %71 : vector<16x128xf32>
    %73 = arith.truncf %70 : vector<32x128xf32> to vector<32x128xbf16>
    %cst_42 = arith.constant dense<0.000000e+00> : vector<32x256xf32>
    %74 = tpu.matmul %73, %30, %cst_42 {dimension_numbers = #tpu.dot_dimension_numbers<[1], [0], [0], [1], [0, 0, 1, 1], [], []>} : vector<32x128xbf16>, vector<128x256xbf16>, vector<32x256xf32> -> vector<32x256xf32>
    %75 = vector.extract_strided_slice %74 {offsets = [0, 0], sizes = [32, 128], strides = [1, 1]} : vector<32x256xf32> to vector<32x128xf32>
    %76 = arith.addf %75, %9 : vector<32x128xf32>
    %77 = vector.shape_cast %76 : vector<32x128xf32> to vector<2x16x128xf32>
    %78 = arith.truncf %77 : vector<2x16x128xf32> to vector<2x16x128xbf16>
    %79 = vector.extract_strided_slice %74 {offsets = [0, 128], sizes = [32, 128], strides = [1, 1]} : vector<32x256xf32> to vector<32x128xf32>
    %80 = vector.shape_cast %79 : vector<32x128xf32> to vector<2x16x128xf32>
    %81 = arith.truncf %80 : vector<2x16x128xf32> to vector<2x16x128xbf16>
    %82 = arith.truncf %72 : vector<16x128xf32> to vector<16x128xbf16>
    %cst_43 = arith.constant dense<0.000000e+00> : vector<16x128xf32>
    %83 = tpu.matmul %82, %18, %cst_43 {dimension_numbers = #tpu.dot_dimension_numbers<[1], [0], [0], [1], [0, 0, 1, 1], [], []>} : vector<16x128xbf16>, vector<128x128xbf16>, vector<16x128xf32> -> vector<16x128xf32>
    %84 = vector.shape_cast %83 : vector<16x128xf32> to vector<2x8x128xf32>
    %85 = arith.truncf %84 : vector<2x8x128xf32> to vector<2x8x128xbf16>
    "tpu.trace_start"() <{level = 10 : i32, message = "bqd,bkd->bqk"}> : () -> ()
    %cst_44 = arith.constant dense<0.000000e+00> : vector<2x8x16xf32>
    %86 = tpu.matmul %85, %78, %cst_44 {dimension_numbers = #tpu.dot_dimension_numbers<[2], [2], [1], [1], [0, 0, 0, 1, 1, 1], [0], [0]>} : vector<2x8x128xbf16>, vector<2x16x128xbf16>, vector<2x8x16xf32> -> vector<2x8x16xf32>
    "tpu.trace_stop"() : () -> ()
    %cst_45 = arith.constant dense<0xFF800000> : vector<2x8xf32>
    %87 = vector.multi_reduction <maximumf>, %86, %cst_45 [2] : vector<2x8x16xf32> to vector<2x8xf32>
    %88 = vector.shape_cast %87 : vector<2x8xf32> to vector<2x8x1xf32>
    %89 = vector.broadcast %88 : vector<2x8x1xf32> to vector<2x8x16xf32>
    %90 = arith.subf %86, %89 : vector<2x8x16xf32>
    %91 = math.exp %90 : vector<2x8x16xf32>
    %cst_46 = arith.constant dense<0.000000e+00> : vector<2x8xf32>
    %92 = vector.multi_reduction <add>, %91, %cst_46 [2] : vector<2x8x16xf32> to vector<2x8xf32>
    %93 = vector.shape_cast %92 : vector<2x8xf32> to vector<2x8x1xf32>
    %94 = tpu.reciprocal %93 {approx = true} : vector<2x8x1xf32> -> vector<2x8x1xf32>
    %95 = vector.broadcast %94 : vector<2x8x1xf32> to vector<2x8x16xf32>
    %96 = arith.mulf %91, %95 : vector<2x8x16xf32>
    %97 = arith.truncf %96 : vector<2x8x16xf32> to vector<2x8x16xbf16>
    "tpu.trace_start"() <{level = 10 : i32, message = "bqk,bkd->bqd"}> : () -> ()
    %cst_47 = arith.constant dense<0.000000e+00> : vector<2x8x128xf32>
    %98 = tpu.matmul %97, %81, %cst_47 {dimension_numbers = #tpu.dot_dimension_numbers<[2], [1], [1], [2], [0, 0, 0, 1, 1, 2], [0], [0]>} : vector<2x8x16xbf16>, vector<2x16x128xbf16>, vector<2x8x128xf32> -> vector<2x8x128xf32>
    "tpu.trace_stop"() : () -> ()
    %99 = vector.shape_cast %98 : vector<2x8x128xf32> to vector<16x128xf32>
    %100 = arith.truncf %99 : vector<16x128xf32> to vector<16x128xbf16>
    %cst_48 = arith.constant dense<0.000000e+00> : vector<16x128xf32>
    %101 = tpu.matmul %100, %20, %cst_48 {dimension_numbers = #tpu.dot_dimension_numbers<[1], [0], [0], [1], [0, 0, 1, 1], [], []>} : vector<16x128xbf16>, vector<128x128xbf16>, vector<16x128xf32> -> vector<16x128xf32>
    %102 = arith.addf %72, %101 : vector<16x128xf32>
    %103 = arith.truncf %102 : vector<16x128xf32> to vector<16x128xbf16>
    %cst_49 = arith.constant dense<0.000000e+00> : vector<16x128xf32>
    %104 = tpu.matmul %103, %22, %cst_49 {dimension_numbers = #tpu.dot_dimension_numbers<[1], [0], [0], [1], [0, 0, 1, 1], [], []>} : vector<16x128xbf16>, vector<128x128xbf16>, vector<16x128xf32> -> vector<16x128xf32>
    %105 = vector.broadcast %4 : vector<1x128xf32> to vector<16x128xf32>
    %106 = arith.addf %104, %105 : vector<16x128xf32>
    %cst_50 = arith.constant 0.000000e+00 : f32
    %107 = vector.broadcast %cst_50 : f32 to vector<16x128xf32>
    %108 = arith.maximumf %106, %107 : vector<16x128xf32>
    %109 = arith.truncf %108 : vector<16x128xf32> to vector<16x128xbf16>
    %cst_51 = arith.constant dense<0.000000e+00> : vector<16x128xf32>
    %110 = tpu.matmul %109, %24, %cst_51 {dimension_numbers = #tpu.dot_dimension_numbers<[1], [0], [0], [1], [0, 0, 1, 1], [], []>} : vector<16x128xbf16>, vector<128x128xbf16>, vector<16x128xf32> -> vector<16x128xf32>
    %111 = vector.broadcast %5 : vector<1x128xf32> to vector<16x128xf32>
    %112 = arith.addf %110, %111 : vector<16x128xf32>
    %113 = vector.shape_cast %112 : vector<16x128xf32> to vector<2x8x128xf32>
    %114 = arith.truncf %113 : vector<2x8x128xf32> to vector<2x8x128xbf16>
    %115 = vector.shape_cast %70 : vector<32x128xf32> to vector<2x16x128xf32>
    %116 = arith.truncf %115 : vector<2x16x128xf32> to vector<2x16x128xbf16>
    "tpu.trace_start"() <{level = 10 : i32, message = "bqd,bkd->bqk"}> : () -> ()
    %cst_52 = arith.constant dense<0.000000e+00> : vector<2x8x16xf32>
    %117 = tpu.matmul %114, %116, %cst_52 {dimension_numbers = #tpu.dot_dimension_numbers<[2], [2], [1], [1], [0, 0, 0, 1, 1, 1], [0], [0]>} : vector<2x8x128xbf16>, vector<2x16x128xbf16>, vector<2x8x16xf32> -> vector<2x8x16xf32>
    "tpu.trace_stop"() : () -> ()
    %118 = vector.extract_strided_slice %117 {offsets = [0, 1, 0], sizes = [2, 1, 16], strides = [1, 1, 1]} : vector<2x8x16xf32> to vector<2x1x16xf32>
    %119 = vector.shape_cast %118 : vector<2x1x16xf32> to vector<2x16xf32>
    %120 = arith.truncf %119 : vector<2x16xf32> to vector<2x16xbf16>
    %cst_53 = arith.constant dense<0.000000e+00> : vector<2x256xf32>
    %121 = tpu.matmul %120, %32, %cst_53 {dimension_numbers = #tpu.dot_dimension_numbers<[1], [0], [0], [1], [0, 0, 1, 1], [], []>} : vector<2x16xbf16>, vector<16x256xbf16>, vector<2x256xf32> -> vector<2x256xf32>
    %c0_54 = arith.constant 0 : index
    %c0_55 = arith.constant 0 : index
    %122 = vector.load %arg5[%c0_54, %c0_55] : memref<2x256xf32, #tpu.memory_space<vmem>>, vector<2x256xf32>
    tpu.vector_store %arg5[%c0_54, %c0_55], %121 {strides = array<i32>} : memref<2x256xf32, #tpu.memory_space<vmem>>, vector<2x256xf32>,
    %cst_56 = arith.constant dense<0.000000e+00> : vector<16x128xf32>
    %123 = tpu.matmul %103, %26, %cst_56 {dimension_numbers = #tpu.dot_dimension_numbers<[1], [0], [0], [1], [0, 0, 1, 1], [], []>} : vector<16x128xbf16>, vector<128x128xbf16>, vector<16x128xf32> -> vector<16x128xf32>
    %124 = vector.broadcast %6 : vector<1x128xf32> to vector<16x128xf32>
    %125 = arith.addf %123, %124 : vector<16x128xf32>
    %cst_57 = arith.constant 0.000000e+00 : f32
    %126 = vector.broadcast %cst_57 : f32 to vector<16x128xf32>
    %127 = arith.maximumf %125, %126 : vector<16x128xf32>
    %128 = arith.truncf %127 : vector<16x128xf32> to vector<16x128xbf16>
    %cst_58 = arith.constant dense<0.000000e+00> : vector<16x128xf32>
    %129 = tpu.matmul %128, %28, %cst_58 {dimension_numbers = #tpu.dot_dimension_numbers<[1], [0], [0], [1], [0, 0, 1, 1], [], []>} : vector<16x128xbf16>, vector<128x128xbf16>, vector<16x128xf32> -> vector<16x128xf32>
    %130 = vector.broadcast %7 : vector<1x128xf32> to vector<16x128xf32>
    %131 = arith.addf %129, %130 : vector<16x128xf32>
    %132 = vector.shape_cast %131 : vector<16x128xf32> to vector<2x8x128xf32>
    %133 = vector.extract_strided_slice %132 {offsets = [0, 0, 0], sizes = [2, 1, 128], strides = [1, 1, 1]} : vector<2x8x128xf32> to vector<2x1x128xf32>
    %134 = vector.shape_cast %133 : vector<2x1x128xf32> to vector<2x128xf32>
    %c0_59 = arith.constant 0 : index
    %c0_60 = arith.constant 0 : index
    %135 = vector.load %arg6[%c0_59, %c0_60] : memref<2x128xf32, #tpu.memory_space<vmem>>, vector<2x128xf32>
    tpu.vector_store %arg6[%c0_59, %c0_60], %134 {strides = array<i32>} : memref<2x128xf32, #tpu.memory_space<vmem>>, vector<2x128xf32>,
    return
  }
}

</mosaic_0001>

<llo_original>
// kernel: crohn_sam_forward.1
$region0: #{crohn_sam_forward.1}
  #allocation0 [shape = 'u32[]', space=smem, size = 0x4, offset = 0x4, fixed_abs, tag = 'smem constant byte address 0x4 - core index']
  #allocation1 [shape = 'u32[72,128]{1,0:T(1,128)}', space=vmem, size = 0x9000, scoped, tag = 'internal scratch']
  %s0 = inlined_call_operand.vmem [shape: bf16[32,64], index: 0, kind: input, shape index: {}]
  %s1 = inlined_call_operand.vmem [shape: f32[16,128], index: 1, kind: input, shape index: {}]
  %s2 = inlined_call_operand.vmem [shape: f32[56,128], index: 2, kind: input, shape index: {}]
  %s3 = inlined_call_operand.vmem [shape: bf16[9,128,128], index: 3, kind: input, shape index: {}]
  %s4 = inlined_call_operand.vmem [shape: bf16[2,128,256], index: 4, kind: input, shape index: {}]
  %s5 = inlined_call_operand.vmem [shape: f32[2,256], index: 5, kind: output, shape index: {0}]
  %s6 = inlined_call_operand.vmem [shape: f32[2,128], index: 6, kind: output, shape index: {1}]
  %7 = xla_tuple %s5, %s6
  %s8 = sld [smem:[#allocation0]]
  $region38: #{crohn_sam_forward.1} parent=0
    _
  %s10 = ssub.s32 1, %s8
  %s11 = scalar_select 0, %s10, %s8
  // Predicated region
  $region2: #{crohn_sam_forward.1} parent=0 // pred_check
    _
  $region3: #{crohn_sam_forward.1} parent=0 // pred_check_branch
    %13 = sbr.rel (0) target = $region5
  $region4: #{crohn_sam_forward.1} parent=0 // pred_region
    _
  $region5: #{crohn_sam_forward.1} parent=0 // pred_fallthru
    _
  // Predicated region
  $region6: #{crohn_sam_forward.1} parent=0 // pred_check
    _
  $region7: #{crohn_sam_forward.1} parent=0 // pred_check_branch
    %15 = sbr.rel (0) target = $region9
  $region8: #{crohn_sam_forward.1} parent=0 // pred_region
    _
  $region9: #{crohn_sam_forward.1} parent=0 // pred_fallthru
    _
  // Predicated region
  $region10: #{crohn_sam_forward.1} parent=0 // pred_check
    _
  $region11: #{crohn_sam_forward.1} parent=0 // pred_check_branch
    %17 = sbr.rel (0) target = $region13
  $region12: #{crohn_sam_forward.1} parent=0 // pred_region
    _
  $region13: #{crohn_sam_forward.1} parent=0 // pred_fallthru
    _
  // Predicated region
  $region14: #{crohn_sam_forward.1} parent=0 // pred_check
    _
  $region15: #{crohn_sam_forward.1} parent=0 // pred_check_branch
    %19 = sbr.rel (0) target = $region17
  $region16: #{crohn_sam_forward.1} parent=0 // pred_region
    _
  $region17: #{crohn_sam_forward.1} parent=0 // pred_fallthru
    _
  // Predicated region
  $region18: #{crohn_sam_forward.1} parent=0 // pred_check
    _
  $region19: #{crohn_sam_forward.1} parent=0 // pred_check_branch
    %21 = sbr.rel (0) target = $region21
  $region20: #{crohn_sam_forward.1} parent=0 // pred_region
    _
  $region21: #{crohn_sam_forward.1} parent=0 // pred_fallthru
    _
  %v23 = vld [vmem:[%s2] sm:$0xff]
  %v24 = vld [vmem:[%s2 + $0x8] sm:$0xff]
  %v25 = vld [vmem:[%s2 + $0x10] sm:$0xff]
  %v26 = vld [vmem:[%s2 + $0x18] sm:$0xff]
  %v27 = vld [vmem:[%s2 + $0x20] sm:$0xff]
  %v28 = vld [vmem:[%s2 + $0x28] sm:$0xff]
  %v29 = vld [vmem:[%s2 + $0x30] sm:$0xff]
  %v30 = vld [vmem:[%s3] sm:$0xf]
  %v31 = vld [vmem:[%s3 + $0x4] sm:$0xf]
  %v32 = vld [vmem:[%s3 + $0x8] sm:$0xf]
  %v33 = vld [vmem:[%s3 + $0xc] sm:$0xf]
  %v34 = vld [vmem:[%s3 + $0x10] sm:$0xf]
  %v35 = vld [vmem:[%s3 + $0x14] sm:$0xf]
  %v36 = vld [vmem:[%s3 + $0x18] sm:$0xf]
  %v37 = vld [vmem:[%s3 + $0x1c] sm:$0xf]
  %s38 = scalar_lea.vmem %s3, 64
  %v39 = vld [vmem:[%s38] sm:$0xf]
  %v40 = vld [vmem:[%s38 + $0x4] sm:$0xf]
  %v41 = vld [vmem:[%s38 + $0x8] sm:$0xf]
  %v42 = vld [vmem:[%s38 + $0xc] sm:$0xf]
  %v43 = vld [vmem:[%s38 + $0x10] sm:$0xf]
  %v44 = vld [vmem:[%s38 + $0x14] sm:$0xf]
  %v45 = vld [vmem:[%s38 + $0x18] sm:$0xf]
  %v46 = vld [vmem:[%s38 + $0x1c] sm:$0xf]
  %v47 = vld [vmem:[%s38 + $0x20] sm:$0xf]
  %v48 = vld [vmem:[%s38 + $0x24] sm:$0xf]
  %v49 = vld [vmem:[%s38 + $0x28] sm:$0xf]
  %v50 = vld [vmem:[%s38 + $0x2c] sm:$0xf]
  %v51 = vld [vmem:[%s38 + $0x30] sm:$0xf]
  %v52 = vld [vmem:[%s38 + $0x34] sm:$0xf]
  %v53 = vld [vmem:[%s38 + $0x38] sm:$0xf]
  %v54 = vld [vmem:[%s38 + $0x3c] sm:$0xf]
  %s55 = scalar_lea.vmem %s3, 128
  %v56 = vld [vmem:[%s55] sm:$0xf]
  %v57 = vld [vmem:[%s55 + $0x4] sm:$0xf]
  %v58 = vld [vmem:[%s55 + $0x8] sm:$0xf]
  %v59 = vld [vmem:[%s55 + $0xc] sm:$0xf]
  %v60 = vld [vmem:[%s55 + $0x10] sm:$0xf]
  %v61 = vld [vmem:[%s55 + $0x14] sm:$0xf]
  %v62 = vld [vmem:[%s55 + $0x18] sm:$0xf]
  %v63 = vld [vmem:[%s55 + $0x1c] sm:$0xf]
  %v64 = vld [vmem:[%s55 + $0x20] sm:$0xf]
  %v65 = vld [vmem:[%s55 + $0x24] sm:$0xf]
  %v66 = vld [vmem:[%s55 + $0x28] sm:$0xf]
  %v67 = vld [vmem:[%s55 + $0x2c] sm:$0xf]
  %v68 = vld [vmem:[%s55 + $0x30] sm:$0xf]
  %v69 = vld [vmem:[%s55 + $0x34] sm:$0xf]
  %v70 = vld [vmem:[%s55 + $0x38] sm:$0xf]
  %v71 = vld [vmem:[%s55 + $0x3c] sm:$0xf]
  %s72 = scalar_lea.vmem %s3, 192
  %v73 = vld [vmem:[%s72] sm:$0xf]
  %v74 = vld [vmem:[%s72 + $0x4] sm:$0xf]
  %v75 = vld [vmem:[%s72 + $0x8] sm:$0xf]
  %v76 = vld [vmem:[%s72 + $0xc] sm:$0xf]
  %v77 = vld [vmem:[%s72 + $0x10] sm:$0xf]
  %v78 = vld [vmem:[%s72 + $0x14] sm:$0xf]
  %v79 = vld [vmem:[%s72 + $0x18] sm:$0xf]
  %v80 = vld [vmem:[%s72 + $0x1c] sm:$0xf]
  %v81 = vld [vmem:[%s72 + $0x20] sm:$0xf]
  %v82 = vld [vmem:[%s72 + $0x24] sm:$0xf]
  %v83 = vld [vmem:[%s72 + $0x28] sm:$0xf]
  %v84 = vld [vmem:[%s72 + $0x2c] sm:$0xf]
  %v85 = vld [vmem:[%s72 + $0x30] sm:$0xf]
  %v86 = vld [vmem:[%s72 + $0x34] sm:$0xf]
  %v87 = vld [vmem:[%s72 + $0x38] sm:$0xf]
  %v88 = vld [vmem:[%s72 + $0x3c] sm:$0xf]
  %s89 = scalar_lea.vmem %s3, 256
  %v90 = vld [vmem:[%s89] sm:$0xf]
  %v91 = vld [vmem:[%s89 + $0x4] sm:$0xf]
  %v92 = vld [vmem:[%s89 + $0x8] sm:$0xf]
  %v93 = vld [vmem:[%s89 + $0xc] sm:$0xf]
  %v94 = vld [vmem:[%s89 + $0x10] sm:$0xf]
  %v95 = vld [vmem:[%s89 + $0x14] sm:$0xf]
  %v96 = vld [vmem:[%s89 + $0x18] sm:$0xf]
  %v97 = vld [vmem:[%s89 + $0x1c] sm:$0xf]
  %v98 = vld [vmem:[%s89 + $0x20] sm:$0xf]
  %v99 = vld [vmem:[%s89 + $0x24] sm:$0xf]
  %v100 = vld [vmem:[%s89 + $0x28] sm:$0xf]
  %v101 = vld [vmem:[%s89 + $0x2c] sm:$0xf]
  %v102 = vld [vmem:[%s89 + $0x30] sm:$0xf]
  %v103 = vld [vmem:[%s89 + $0x34] sm:$0xf]
  %v104 = vld [vmem:[%s89 + $0x38] sm:$0xf]
  %v105 = vld [vmem:[%s89 + $0x3c] sm:$0xf]
  %s106 = scalar_lea.vmem %s3, 320
  %v107 = vld [vmem:[%s106] sm:$0xf]
  %v108 = vld [vmem:[%s106 + $0x4] sm:$0xf]
  %v109 = vld [vmem:[%s106 + $0x8] sm:$0xf]
  %v110 = vld [vmem:[%s106 + $0xc] sm:$0xf]
  %v111 = vld [vmem:[%s106 + $0x10] sm:$0xf]
  %v112 = vld [vmem:[%s106 + $0x14] sm:$0xf]
  %v113 = vld [vmem:[%s106 + $0x18] sm:$0xf]
  %v114 = vld [vmem:[%s106 + $0x1c] sm:$0xf]
  %v115 = vld [vmem:[%s106 + $0x20] sm:$0xf]
  %v116 = vld [vmem:[%s106 + $0x24] sm:$0xf]
  %v117 = vld [vmem:[%s106 + $0x28] sm:$0xf]
  %v118 = vld [vmem:[%s106 + $0x2c] sm:$0xf]
  %v119 = vld [vmem:[%s106 + $0x30] sm:$0xf]
  %v120 = vld [vmem:[%s106 + $0x34] sm:$0xf]
  %v121 = vld [vmem:[%s106 + $0x38] sm:$0xf]
  %v122 = vld [vmem:[%s106 + $0x3c] sm:$0xf]
  %s123 = scalar_lea.vmem %s3, 384
  %v124 = vld [vmem:[%s123] sm:$0xf]
  %v125 = vld [vmem:[%s123 + $0x4] sm:$0xf]
  %v126 = vld [vmem:[%s123 + $0x8] sm:$0xf]
  %v127 = vld [vmem:[%s123 + $0xc] sm:$0xf]
  %v128 = vld [vmem:[%s123 + $0x10] sm:$0xf]
  %v129 = vld [vmem:[%s123 + $0x14] sm:$0xf]
  %v130 = vld [vmem:[%s123 + $0x18] sm:$0xf]
  %v131 = vld [vmem:[%s123 + $0x1c] sm:$0xf]
  %v132 = vld [vmem:[%s123 + $0x20] sm:$0xf]
  %v133 = vld [vmem:[%s123 + $0x24] sm:$0xf]
  %v134 = vld [vmem:[%s123 + $0x28] sm:$0xf]
  %v135 = vld [vmem:[%s123 + $0x2c] sm:$0xf]
  %v136 = vld [vmem:[%s123 + $0x30] sm:$0xf]
  %v137 = vld [vmem:[%s123 + $0x34] sm:$0xf]
  %v138 = vld [vmem:[%s123 + $0x38] sm:$0xf]
  %v139 = vld [vmem:[%s123 + $0x3c] sm:$0xf]
  %s140 = scalar_lea.vmem %s3, 448
  %v141 = vld [vmem:[%s140] sm:$0xf]
  %v142 = vld [vmem:[%s140 + $0x4] sm:$0xf]
  %v143 = vld [vmem:[%s140 + $0x8] sm:$0xf]
  %v144 = vld [vmem:[%s140 + $0xc] sm:$0xf]
  %v145 = vld [vmem:[%s140 + $0x10] sm:$0xf]
  %v146 = vld [vmem:[%s140 + $0x14] sm:$0xf]
  %v147 = vld [vmem:[%s140 + $0x18] sm:$0xf]
  %v148 = vld [vmem:[%s140 + $0x1c] sm:$0xf]
  %v149 = vld [vmem:[%s140 + $0x20] sm:$0xf]
  %v150 = vld [vmem:[%s140 + $0x24] sm:$0xf]
  %v151 = vld [vmem:[%s140 + $0x28] sm:$0xf]
  %v152 = vld [vmem:[%s140 + $0x2c] sm:$0xf]
  %v153 = vld [vmem:[%s140 + $0x30] sm:$0xf]
  %v154 = vld [vmem:[%s140 + $0x34] sm:$0xf]
  %v155 = vld [vmem:[%s140 + $0x38] sm:$0xf]
  %v156 = vld [vmem:[%s140 + $0x3c] sm:$0xf]
  %s157 = scalar_lea.vmem %s3, 512
  %v158 = vld [vmem:[%s157] sm:$0xf]
  %v159 = vld [vmem:[%s157 + $0x4] sm:$0xf]
  %v160 = vld [vmem:[%s157 + $0x8] sm:$0xf]
  %v161 = vld [vmem:[%s157 + $0xc] sm:$0xf]
  %v162 = vld [vmem:[%s157 + $0x10] sm:$0xf]
  %v163 = vld [vmem:[%s157 + $0x14] sm:$0xf]
  %v164 = vld [vmem:[%s157 + $0x18] sm:$0xf]
  %v165 = vld [vmem:[%s157 + $0x1c] sm:$0xf]
  %v166 = vld [vmem:[%s157 + $0x20] sm:$0xf]
  %v167 = vld [vmem:[%s157 + $0x24] sm:$0xf]
  %v168 = vld [vmem:[%s157 + $0x28] sm:$0xf]
  %v169 = vld [vmem:[%s157 + $0x2c] sm:$0xf]
  %v170 = vld [vmem:[%s157 + $0x30] sm:$0xf]
  %v171 = vld [vmem:[%s157 + $0x34] sm:$0xf]
  %v172 = vld [vmem:[%s157 + $0x38] sm:$0xf]
  %v173 = vld [vmem:[%s157 + $0x3c] sm:$0xf]
  %v174 = vld [vmem:[%s4] sm:$0xff]
  %v175 = vld [vmem:[%s4 + $0x8] sm:$0xff]
  %v176 = vld [vmem:[%s4 + $0x10] sm:$0xff]
  %v177 = vld [vmem:[%s4 + $0x18] sm:$0xff]
  %v178 = vld [vmem:[%s4 + $0x20] sm:$0xff]
  %v179 = vld [vmem:[%s4 + $0x28] sm:$0xff]
  %v180 = vld [vmem:[%s4 + $0x30] sm:$0xff]
  %v181 = vld [vmem:[%s4 + $0x38] sm:$0xff]
  %v182 = vld [vmem:[%s4 + $0x40] sm:$0xff]
  %v183 = vld [vmem:[%s4 + $0x48] sm:$0xff]
  %v184 = vld [vmem:[%s4 + $0x50] sm:$0xff]
  %v185 = vld [vmem:[%s4 + $0x58] sm:$0xff]
  %v186 = vld [vmem:[%s4 + $0x60] sm:$0xff]
  %v187 = vld [vmem:[%s4 + $0x68] sm:$0xff]
  %v188 = vld [vmem:[%s4 + $0x70] sm:$0xff]
  %v189 = vld [vmem:[%s4 + $0x78] sm:$0xff]
  %s190 = scalar_lea.vmem %s4, 128
  %v191 = vld [vmem:[%s190] sm:$0xff]
  %v192 = vld [vmem:[%s190 + $0x8] sm:$0xff]
  %v193 = vld [vmem:[%s0] sm:$0xf]
  %v194 = vld [vmem:[%s0 + $0x4] sm:$0xf]
  %v195 = vld [vmem:[%s0 + $0x8] sm:$0xf]
  %v196 = vld [vmem:[%s0 + $0xc] sm:$0xf]
  %v197 = vperm.slane %v23, 0
  %v202 = vunpack.c.l.b16 %v193
  %v203 = vunpack.c.l.b16 %v194
  %v204 = vunpack.c.l.b16 %v195
  %v205 = vunpack.c.l.b16 %v196
  %v206 = vpack.c.b16 %v203, %v202
  %v207 = vpack.c.b16 %v205, %v204
  %v216 = vunpack.c.l.b16 %v30
  %v217 = vunpack.c.l.b16 %v31
  %v218 = vunpack.c.l.b16 %v32
  %v219 = vunpack.c.l.b16 %v33
  %v220 = vunpack.c.l.b16 %v34
  %v221 = vunpack.c.l.b16 %v35
  %v222 = vunpack.c.l.b16 %v36
  %v223 = vunpack.c.l.b16 %v37
  %v224 = vpack.c.b16 %v217, %v216
  %v225 = vpack.c.b16 %v219, %v218
  %v226 = vpack.c.b16 %v221, %v220
  %v227 = vpack.c.b16 %v223, %v222
  %vm232 = vcmask 523264
  %v234 = vsel %vm232, %v206, 0
  %v237 = vsel %vm232, %v207, 0
  %239 = vmatpush.bf16.msra.mxu0 0
  %240 = vmatpush.bf16.msra.mxu0 0
  %241 = vmatpush.bf16.msra.mxu0 0
  %242 = vmatpush.bf16.msra.mxu0 0
  %243 = vmatpush.bf16.msra.mxu0 %v227
  %244 = vmatpush.bf16.msra.mxu0 %v226
  %245 = vmatpush.bf16.msra.mxu0 %v225
  %246 = vmatpush.bf16.msra.mxu0 %v224
  %247 = vmatmul.bf16.gmra.mxu0 %v234
  %v248 = vpop.f32.mrf.mxu0
  %v249 = vadd.f32 %v197, %v248
  %v250 = vpop.f32.mrf.mxu0
  %v251 = vadd.f32 %v197, %v250
  %252 = vmatmul.bf16.gmra.mxu0 %v237
  %v253 = vpop.f32.mrf.mxu0
  %v254 = vadd.f32 %v197, %v253
  %v255 = vpop.f32.mrf.mxu0
  %v256 = vadd.f32 %v197, %v255
  %257 = vdwg.mxu0
  %v258 = vlaneseq
  %v259 = vand.u32 %v258, 127
  %vm260 = vcmp.lt.s32.totalorder %v259, 32
  %261 = vadd.xlane.f32.xlu0 %v249
  %v262 = vpop.xlane.xlu0 %261
  %263 = vadd.xlane.f32.xlu0 %v251
  %v264 = vpop.xlane.xlu0 %263
  %265 = vadd.xlane.f32.xlu0 %v254
  %v266 = vpop.xlane.xlu0 %265
  %267 = vadd.xlane.f32.xlu0 %v256
  %v268 = vpop.xlane.xlu0 %267
  %v269 = vmul.f32 %v262, 0.03125
  %v270 = vmul.f32 %v264, 0.03125
  %v271 = vmul.f32 %v266, 0.03125
  %v272 = vmul.f32 %v268, 0.03125
  %v273 = vsub.f32 %v249, %v269
  %v274 = vsub.f32 %v251, %v270
  %v275 = vsub.f32 %v254, %v271
  %v276 = vsub.f32 %v256, %v272
  %v277 = vsel %vm260, %v273, 0.0
  %v278 = vsel %vm260, %v274, 0.0
  %v279 = vsel %vm260, %v275, 0.0
  %v280 = vsel %vm260, %v276, 0.0
  %v281 = vmul.f32 %v277, %v277
  %v282 = vmul.f32 %v278, %v278
  %v283 = vmul.f32 %v279, %v279
  %v284 = vmul.f32 %v280, %v280
  %285 = vadd.xlane.f32.xlu0 %v281
  %v286 = vpop.xlane.xlu0 %285
  %287 = vadd.xlane.f32.xlu0 %v282
  %v288 = vpop.xlane.xlu0 %287
  %289 = vadd.xlane.f32.xlu0 %v283
  %v290 = vpop.xlane.xlu0 %289
  %291 = vadd.xlane.f32.xlu0 %v284
  %v292 = vpop.xlane.xlu0 %291
  %v293 = vmul.f32 %v286, 0.03125
  %v294 = vmul.f32 %v288, 0.03125
  %v295 = vmul.f32 %v290, 0.03125
  %v296 = vmul.f32 %v292, 0.03125
  %v297 = vadd.f32 %v293, 1e-06
  %v298 = vadd.f32 %v294, 1e-06
  %v299 = vadd.f32 %v295, 1e-06
  %v300 = vadd.f32 %v296, 1e-06
  %v301 = vrsqrt.pop %v297
  %v302 = vmul.f32 %v301, %v297
  %v303 = vmul.f32 %v302, %v301
  %v304 = vmul.f32 0.5, %v303
  %v305 = vsub.f32 1.5, %v304
  %v306 = vmul.f32 %v301, %v305
  %vm307 = vweird.f32 %v297
  %vm308 = vweird.f32 %v301
  %vm309 = vmor %vm307, %vm308
  %v310 = vsel %vm309, %v301, %v306
  %v311 = vrsqrt.pop %v298
  %v312 = vmul.f32 %v311, %v298
  %v313 = vmul.f32 %v312, %v311
  %v314 = vmul.f32 0.5, %v313
  %v315 = vsub.f32 1.5, %v314
  %v316 = vmul.f32 %v311, %v315
  %vm317 = vweird.f32 %v298
  %vm318 = vweird.f32 %v311
  %vm319 = vmor %vm317, %vm318
  %v320 = vsel %vm319, %v311, %v316
  %v321 = vrsqrt.pop %v299
  %v322 = vmul.f32 %v321, %v299
  %v323 = vmul.f32 %v322, %v321
  %v324 = vmul.f32 0.5, %v323
  %v325 = vsub.f32 1.5, %v324
  %v326 = vmul.f32 %v321, %v325
  %vm327 = vweird.f32 %v299
  %vm328 = vweird.f32 %v321
  %vm329 = vmor %vm327, %vm328
  %v330 = vsel %vm329, %v321, %v326
  %v331 = vrsqrt.pop %v300
  %v332 = vmul.f32 %v331, %v300
  %v333 = vmul.f32 %v332, %v331
  %v334 = vmul.f32 0.5, %v333
  %v335 = vsub.f32 1.5, %v334
  %v336 = vmul.f32 %v331, %v335
  %vm337 = vweird.f32 %v300
  %vm338 = vweird.f32 %v331
  %vm339 = vmor %vm337, %vm338
  %v340 = vsel %vm339, %v331, %v336
  %v341 = vmul.f32 %v277, %v310
  %v342 = vmul.f32 %v278, %v320
  %v343 = vmul.f32 %v279, %v330
  %v344 = vmul.f32 %v280, %v340
  %v345 = vpack.c.bf16 %v342, %v341
  %v346 = vpack.c.bf16 %v344, %v343
  %v347 = vperm.slane %v23, 1
  %v364 = vunpack.c.l.b16 %v39
  %v365 = vunpack.c.l.b16 %v40
  %v366 = vunpack.c.l.b16 %v41
  %v367 = vunpack.c.l.b16 %v42
  %v368 = vunpack.c.l.b16 %v43
  %v369 = vunpack.c.l.b16 %v44
  %v370 = vunpack.c.l.b16 %v45
  %v371 = vunpack.c.l.b16 %v46
  %v372 = vunpack.c.l.b16 %v47
  %v373 = vunpack.c.l.b16 %v48
  %v374 = vunpack.c.l.b16 %v49
  %v375 = vunpack.c.l.b16 %v50
  %v376 = vunpack.c.l.b16 %v51
  %v377 = vunpack.c.l.b16 %v52
  %v378 = vunpack.c.l.b16 %v53
  %v379 = vunpack.c.l.b16 %v54
  %v380 = vpack.c.b16 %v365, %v364
  %v381 = vpack.c.b16 %v367, %v366
  %v382 = vpack.c.b16 %v369, %v368
  %v383 = vpack.c.b16 %v371, %v370
  %v384 = vpack.c.b16 %v373, %v372
  %v385 = vpack.c.b16 %v375, %v374
  %v386 = vpack.c.b16 %v377, %v376
  %v387 = vpack.c.b16 %v379, %v378
  %396 = vmatpush.bf16.msra.mxu0 %v387
  %397 = vmatpush.bf16.msra.mxu0 %v386
  %398 = vmatpush.bf16.msra.mxu0 %v385
  %399 = vmatpush.bf16.msra.mxu0 %v384
  %400 = vmatpush.bf16.msra.mxu0 %v383
  %401 = vmatpush.bf16.msra.mxu0 %v382
  %402 = vmatpush.bf16.msra.mxu0 %v381
  %403 = vmatpush.bf16.msra.mxu0 %v380
  %404 = vmatmul.bf16.gmra.mxu0 %v345
  %v405 = vpop.f32.mrf.mxu0
  %v406 = vadd.f32 %v347, %v405
  %v407 = vpop.f32.mrf.mxu0
  %v408 = vadd.f32 %v347, %v407
  %409 = vmatmul.bf16.gmra.mxu0 %v346
  %v410 = vpop.f32.mrf.mxu0
  %v411 = vadd.f32 %v347, %v410
  %v412 = vpop.f32.mrf.mxu0
  %v413 = vadd.f32 %v347, %v412
  %414 = vdwg.mxu0
  %v415 = vmax.f32 %v406, 0.0
  %v416 = vmax.f32 %v408, 0.0
  %v417 = vmax.f32 %v411, 0.0
  %v418 = vmax.f32 %v413, 0.0
  %v419 = vpack.c.bf16 %v416, %v415
  %v420 = vpack.c.bf16 %v418, %v417
  %v437 = vunpack.c.l.b16 %v56
  %v438 = vunpack.c.l.b16 %v57
  %v439 = vunpack.c.l.b16 %v58
  %v440 = vunpack.c.l.b16 %v59
  %v441 = vunpack.c.l.b16 %v60
  %v442 = vunpack.c.l.b16 %v61
  %v443 = vunpack.c.l.b16 %v62
  %v444 = vunpack.c.l.b16 %v63
  %v445 = vunpack.c.l.b16 %v64
  %v446 = vunpack.c.l.b16 %v65
  %v447 = vunpack.c.l.b16 %v66
  %v448 = vunpack.c.l.b16 %v67
  %v449 = vunpack.c.l.b16 %v68
  %v450 = vunpack.c.l.b16 %v69
  %v451 = vunpack.c.l.b16 %v70
  %v452 = vunpack.c.l.b16 %v71
  %v453 = vpack.c.b16 %v438, %v437
  %v454 = vpack.c.b16 %v440, %v439
  %v455 = vpack.c.b16 %v442, %v441
  %v456 = vpack.c.b16 %v444, %v443
  %v457 = vpack.c.b16 %v446, %v445
  %v458 = vpack.c.b16 %v448, %v447
  %v459 = vpack.c.b16 %v450, %v449
  %v460 = vpack.c.b16 %v452, %v451
  %469 = vmatpush.bf16.msra.mxu0 %v460
  %470 = vmatpush.bf16.msra.mxu0 %v459
  %471 = vmatpush.bf16.msra.mxu0 %v458
  %472 = vmatpush.bf16.msra.mxu0 %v457
  %473 = vmatpush.bf16.msra.mxu0 %v456
  %474 = vmatpush.bf16.msra.mxu0 %v455
  %475 = vmatpush.bf16.msra.mxu0 %v454
  %476 = vmatpush.bf16.msra.mxu0 %v453
  %477 = vmatmul.bf16.gmra.mxu0 %v419
  %v478 = vpop.f32.mrf.mxu0
  %v479 = vadd.f32 0.0, %v478
  %v480 = vpop.f32.mrf.mxu0
  %v481 = vadd.f32 0.0, %v480
  %482 = vmatmul.bf16.gmra.mxu0 %v420
  %v483 = vpop.f32.mrf.mxu0
  %v484 = vadd.f32 0.0, %v483
  %v485 = vpop.f32.mrf.mxu0
  %v486 = vadd.f32 0.0, %v485
  %487 = vdwg.mxu0
  %v488 = vadd.f32 %v249, %v479
  %v489 = vadd.f32 %v251, %v481
  %v490 = vadd.f32 %v254, %v484
  %v491 = vadd.f32 %v256, %v486
  %v492 = vperm.slane %v23, 2
  %v493 = vadd.f32 %v488, %v492
  %v494 = vadd.f32 %v489, %v492
  %v495 = vadd.f32 %v490, %v492
  %v496 = vadd.f32 %v491, %v492
  %v497 = vperm.slane %v23, 7
  %v498 = vadd.f32 %v493, %v497
  %v499 = vadd.f32 %v494, %v497
  %v500 = vadd.f32 %v495, %v497
  %v501 = vadd.f32 %v496, %v497
  %v502 = vld [vmem:[%s1] sm:$0xff]
  %v503 = vld [vmem:[%s1 + $0x8] sm:$0xff]
  %v504 = vadd.f32 %v28, %v502
  %v505 = vadd.f32 %v29, %v503
  %v506 = vpack.c.bf16 %v499, %v498
  %v507 = vpack.c.bf16 %v501, %v500
  %v524 = vunpack.c.l.b16 %v174
  %v525 = vunpack.c.h.b16 %v174
  %v526 = vunpack.c.l.b16 %v175
  %v527 = vunpack.c.h.b16 %v175
  %v528 = vunpack.c.l.b16 %v176
  %v529 = vunpack.c.h.b16 %v176
  %v530 = vunpack.c.l.b16 %v177
  %v531 = vunpack.c.h.b16 %v177
  %v532 = vunpack.c.l.b16 %v178
  %v533 = vunpack.c.h.b16 %v178
  %v534 = vunpack.c.l.b16 %v179
  %v535 = vunpack.c.h.b16 %v179
  %v536 = vunpack.c.l.b16 %v180
  %v537 = vunpack.c.h.b16 %v180
  %v538 = vunpack.c.l.b16 %v181
  %v539 = vunpack.c.h.b16 %v181
  %v540 = vunpack.c.l.b16 %v182
  %v541 = vunpack.c.h.b16 %v182
  %v542 = vunpack.c.l.b16 %v183
  %v543 = vunpack.c.h.b16 %v183
  %v544 = vunpack.c.l.b16 %v184
  %v545 = vunpack.c.h.b16 %v184
  %v546 = vunpack.c.l.b16 %v185
  %v547 = vunpack.c.h.b16 %v185
  %v548 = vunpack.c.l.b16 %v186
  %v549 = vunpack.c.h.b16 %v186
  %v550 = vunpack.c.l.b16 %v187
  %v551 = vunpack.c.h.b16 %v187
  %v552 = vunpack.c.l.b16 %v188
  %v553 = vunpack.c.h.b16 %v188
  %v554 = vunpack.c.l.b16 %v189
  %v555 = vunpack.c.h.b16 %v189
  %v556 = vpack.c.b16 %v526, %v524
  %v557 = vpack.c.b16 %v527, %v525
  %v558 = vpack.c.b16 %v530, %v528
  %v559 = vpack.c.b16 %v531, %v529
  %v560 = vpack.c.b16 %v534, %v532
  %v561 = vpack.c.b16 %v535, %v533
  %v562 = vpack.c.b16 %v538, %v536
  %v563 = vpack.c.b16 %v539, %v537
  %v564 = vpack.c.b16 %v542, %v540
  %v565 = vpack.c.b16 %v543, %v541
  %v566 = vpack.c.b16 %v546, %v544
  %v567 = vpack.c.b16 %v547, %v545
  %v568 = vpack.c.b16 %v550, %v548
  %v569 = vpack.c.b16 %v551, %v549
  %v570 = vpack.c.b16 %v554, %v552
  %v571 = vpack.c.b16 %v555, %v553
  %588 = vmatpush.bf16.msra.mxu0 %v570
  %589 = vmatpush.bf16.msra.mxu0 %v568
  %590 = vmatpush.bf16.msra.mxu0 %v566
  %591 = vmatpush.bf16.msra.mxu0 %v564
  %592 = vmatpush.bf16.msra.mxu0 %v562
  %593 = vmatpush.bf16.msra.mxu0 %v560
  %594 = vmatpush.bf16.msra.mxu0 %v558
  %595 = vmatpush.bf16.msra.mxu0 %v556
  %596 = vmatmul.bf16.gmra.mxu0 %v506
  %v597 = vpop.f32.mrf.mxu0
  %v598 = vadd.f32 0.0, %v597
  %v599 = vpop.f32.mrf.mxu0
  %v600 = vadd.f32 0.0, %v599
  %601 = vmatmul.bf16.gmra.mxu0 %v507
  %v602 = vpop.f32.mrf.mxu0
  %v603 = vadd.f32 0.0, %v602
  %v604 = vpop.f32.mrf.mxu0
  %v605 = vadd.f32 0.0, %v604
  %606 = vdwg.mxu0
  %607 = vmatpush.bf16.msra.mxu0 %v571
  %608 = vmatpush.bf16.msra.mxu0 %v569
  %609 = vmatpush.bf16.msra.mxu0 %v567
  %610 = vmatpush.bf16.msra.mxu0 %v565
  %611 = vmatpush.bf16.msra.mxu0 %v563
  %612 = vmatpush.bf16.msra.mxu0 %v561
  %613 = vmatpush.bf16.msra.mxu0 %v559
  %614 = vmatpush.bf16.msra.mxu0 %v557
  %615 = vmatmul.bf16.gmra.mxu0 %v506
  %v616 = vpop.f32.mrf.mxu0
  %v617 = vadd.f32 0.0, %v616
  %v618 = vpop.f32.mrf.mxu0
  %v619 = vadd.f32 0.0, %v618
  %620 = vmatmul.bf16.gmra.mxu0 %v507
  %v621 = vpop.f32.mrf.mxu0
  %v622 = vadd.f32 0.0, %v621
  %v623 = vpop.f32.mrf.mxu0
  %v624 = vadd.f32 0.0, %v623
  %625 = vdwg.mxu0
  %v626 = vadd.f32 %v598, %v24
  %v627 = vadd.f32 %v600, %v25
  %v628 = vadd.f32 %v603, %v26
  %v629 = vadd.f32 %v605, %v27
  %v630 = vpack.c.bf16 %v626, %v626
  %v631 = vpack.c.bf16 %v627, %v627
  %v632 = vpack.c.bf16 %v628, %v628
  %v633 = vpack.c.bf16 %v629, %v629
  %v634 = vpack.c.bf16 %v617, %v617
  %v635 = vpack.c.bf16 %v619, %v619
  %v636 = vpack.c.bf16 %v622, %v622
  %v637 = vpack.c.bf16 %v624, %v624
  %v638 = vpack.c.bf16 %v505, %v504
  %v655 = vunpack.c.l.b16 %v73
  %v656 = vunpack.c.l.b16 %v74
  %v657 = vunpack.c.l.b16 %v75
  %v658 = vunpack.c.l.b16 %v76
  %v659 = vunpack.c.l.b16 %v77
  %v660 = vunpack.c.l.b16 %v78
  %v661 = vunpack.c.l.b16 %v79
  %v662 = vunpack.c.l.b16 %v80
  %v663 = vunpack.c.l.b16 %v81
  %v664 = vunpack.c.l.b16 %v82
  %v665 = vunpack.c.l.b16 %v83
  %v666 = vunpack.c.l.b16 %v84
  %v667 = vunpack.c.l.b16 %v85
  %v668 = vunpack.c.l.b16 %v86
  %v669 = vunpack.c.l.b16 %v87
  %v670 = vunpack.c.l.b16 %v88
  %v671 = vpack.c.b16 %v656, %v655
  %v672 = vpack.c.b16 %v658, %v657
  %v673 = vpack.c.b16 %v660, %v659
  %v674 = vpack.c.b16 %v662, %v661
  %v675 = vpack.c.b16 %v664, %v663
  %v676 = vpack.c.b16 %v666, %v665
  %v677 = vpack.c.b16 %v668, %v667
  %v678 = vpack.c.b16 %v670, %v669
  %687 = vmatpush.bf16.msra.mxu0 %v678
  %688 = vmatpush.bf16.msra.mxu0 %v677
  %689 = vmatpush.bf16.msra.mxu0 %v676
  %690 = vmatpush.bf16.msra.mxu0 %v675
  %691 = vmatpush.bf16.msra.mxu0 %v674
  %692 = vmatpush.bf16.msra.mxu0 %v673
  %693 = vmatpush.bf16.msra.mxu0 %v672
  %694 = vmatpush.bf16.msra.mxu0 %v671
  %695 = vmatmul.bf16.gmra.mxu0 %v638
  %v696 = vpop.f32.mrf.mxu0
  %v697 = vadd.f32 0.0, %v696
  %v698 = vpop.f32.mrf.mxu0
  %v699 = vadd.f32 0.0, %v698
  %700 = vdwg.mxu0
  %v701 = vpack.c.bf16 %v697, %v697
  %v702 = vpack.c.bf16 %v699, %v699
  %v705 = vunpack.c.l.b16 %v630
  %v706 = vunpack.c.l.b16 %v631
  %v707 = vpack.c.b16 %v706, %v705
  %709 = vmatpush.bf16.xpose.msra.mxu0 0
  %710 = vmatpush.bf16.xpose.msra.mxu0 0
  %711 = vmatpush.bf16.xpose.msra.mxu0 0
  %712 = vmatpush.bf16.xpose.msra.mxu0 0
  %713 = vmatpush.bf16.xpose.msra.mxu0 0
  %714 = vmatpush.bf16.xpose.msra.mxu0 0
  %715 = vmatpush.bf16.xpose.msra.mxu0 0
  %716 = vmatpush.bf16.xpose.msra.mxu0 %v707
  %717 = vmatmul.bf16.gmra.mxu0 %v701
  %v718 = vpop.f32.mrf.mxu0
  %v719 = vadd.f32 0.0, %v718
  %v720 = vpop.f32.mrf.mxu0
  %721 = vdwg.mxu0
  %v724 = vunpack.c.l.b16 %v632
  %v725 = vunpack.c.l.b16 %v633
  %v726 = vpack.c.b16 %v725, %v724
  %728 = vmatpush.bf16.xpose.msra.mxu0 0
  %729 = vmatpush.bf16.xpose.msra.mxu0 0
  %730 = vmatpush.bf16.xpose.msra.mxu0 0
  %731 = vmatpush.bf16.xpose.msra.mxu0 0
  %732 = vmatpush.bf16.xpose.msra.mxu0 0
  %733 = vmatpush.bf16.xpose.msra.mxu0 0
  %734 = vmatpush.bf16.xpose.msra.mxu0 0
  %735 = vmatpush.bf16.xpose.msra.mxu0 %v726
  %736 = vmatmul.bf16.gmra.mxu0 %v702
  %v737 = vpop.f32.mrf.mxu0
  %v738 = vadd.f32 0.0, %v737
  %v739 = vpop.f32.mrf.mxu0
  %740 = vdwg.mxu0
  %vm741 = vcmask 130048
  %v742 = vsel %vm741, %v719, -inf
  %743 = vmax.xlane.f32.xlu0 %v742
  %v744 = vpop.xlane.xlu0 %743
  %v745 = vsel %vm741, %v738, -inf
  %746 = vmax.xlane.f32.xlu0 %v745
  %v747 = vpop.xlane.xlu0 %746
  %v748 = vsub.f32 %v719, %v744
  %v749 = vsub.f32 %v738, %v747
  %v750 = vmul.f32 %v748, 1.442695
  %v751 = vpow.pop %v750
  %v752 = vmul.f32 %v749, 1.442695
  %v753 = vpow.pop %v752
  %v754 = vsel %vm741, %v751, 0.0
  %755 = vadd.xlane.f32.xlu0 %v754
  %v756 = vpop.xlane.xlu0 %755
  %v757 = vsel %vm741, %v753, 0.0
  %758 = vadd.xlane.f32.xlu0 %v757
  %v759 = vpop.xlane.xlu0 %758
  %v760 = vrcp.pop %v756
  %v761 = vrcp.pop %v759
  %v762 = vmul.f32 %v751, %v760
  %v763 = vmul.f32 %v753, %v761
  %v764 = vpack.c.bf16 %v762, %v762
  %v765 = vpack.c.bf16 %v763, %v763
  %v768 = vunpack.c.l.b16 %v634
  %v769 = vunpack.c.l.b16 %v635
  %v770 = vpack.c.b16 %v769, %v768
  %v773 = vsel %vm741, %v764, 0
  %775 = vmatpush.bf16.msra.mxu0 0
  %776 = vmatpush.bf16.msra.mxu0 0
  %777 = vmatpush.bf16.msra.mxu0 0
  %778 = vmatpush.bf16.msra.mxu0 0
  %779 = vmatpush.bf16.msra.mxu0 0
  %780 = vmatpush.bf16.msra.mxu0 0
  %781 = vmatpush.bf16.msra.mxu0 0
  %782 = vmatpush.bf16.msra.mxu0 %v770
  %783 = vmatmul.bf16.gmra.mxu0 %v773
  %v784 = vpop.f32.mrf.mxu0
  %v785 = vadd.f32 0.0, %v784
  %v786 = vpop.f32.mrf.mxu0
  %787 = vdwg.mxu0
  %v790 = vunpack.c.l.b16 %v636
  %v791 = vunpack.c.l.b16 %v637
  %v792 = vpack.c.b16 %v791, %v790
  %v795 = vsel %vm741, %v765, 0
  %797 = vmatpush.bf16.msra.mxu0 0
  %798 = vmatpush.bf16.msra.mxu0 0
  %799 = vmatpush.bf16.msra.mxu0 0
  %800 = vmatpush.bf16.msra.mxu0 0
  %801 = vmatpush.bf16.msra.mxu0 0
  %802 = vmatpush.bf16.msra.mxu0 0
  %803 = vmatpush.bf16.msra.mxu0 0
  %804 = vmatpush.bf16.msra.mxu0 %v792
  %805 = vmatmul.bf16.gmra.mxu0 %v795
  %v806 = vpop.f32.mrf.mxu0
  %v807 = vadd.f32 0.0, %v806
  %v808 = vpop.f32.mrf.mxu0
  %809 = vdwg.mxu0
  %v810 = vpack.c.bf16 %v807, %v785
  %v827 = vunpack.c.l.b16 %v90
  %v828 = vunpack.c.l.b16 %v91
  %v829 = vunpack.c.l.b16 %v92
  %v830 = vunpack.c.l.b16 %v93
  %v831 = vunpack.c.l.b16 %v94
  %v832 = vunpack.c.l.b16 %v95
  %v833 = vunpack.c.l.b16 %v96
  %v834 = vunpack.c.l.b16 %v97
  %v835 = vunpack.c.l.b16 %v98
  %v836 = vunpack.c.l.b16 %v99
  %v837 = vunpack.c.l.b16 %v100
  %v838 = vunpack.c.l.b16 %v101
  %v839 = vunpack.c.l.b16 %v102
  %v840 = vunpack.c.l.b16 %v103
  %v841 = vunpack.c.l.b16 %v104
  %v842 = vunpack.c.l.b16 %v105
  %v843 = vpack.c.b16 %v828, %v827
  %v844 = vpack.c.b16 %v830, %v829
  %v845 = vpack.c.b16 %v832, %v831
  %v846 = vpack.c.b16 %v834, %v833
  %v847 = vpack.c.b16 %v836, %v835
  %v848 = vpack.c.b16 %v838, %v837
  %v849 = vpack.c.b16 %v840, %v839
  %v850 = vpack.c.b16 %v842, %v841
  %859 = vmatpush.bf16.msra.mxu0 %v850
  %860 = vmatpush.bf16.msra.mxu0 %v849
  %861 = vmatpush.bf16.msra.mxu0 %v848
  %862 = vmatpush.bf16.msra.mxu0 %v847
  %863 = vmatpush.bf16.msra.mxu0 %v846
  %864 = vmatpush.bf16.msra.mxu0 %v845
  %865 = vmatpush.bf16.msra.mxu0 %v844
  %866 = vmatpush.bf16.msra.mxu0 %v843
  %867 = vmatmul.bf16.gmra.mxu0 %v810
  %v868 = vpop.f32.mrf.mxu0
  %v869 = vadd.f32 0.0, %v868
  %v870 = vpop.f32.mrf.mxu0
  %v871 = vadd.f32 0.0, %v870
  %872 = vdwg.mxu0
  %v873 = vadd.f32 %v504, %v869
  %v874 = vadd.f32 %v505, %v871
  %v875 = vpack.c.bf16 %v874, %v873
  %v876 = vperm.slane %v23, 3
  %v893 = vunpack.c.l.b16 %v107
  %v894 = vunpack.c.l.b16 %v108
  %v895 = vunpack.c.l.b16 %v109
  %v896 = vunpack.c.l.b16 %v110
  %v897 = vunpack.c.l.b16 %v111
  %v898 = vunpack.c.l.b16 %v112
  %v899 = vunpack.c.l.b16 %v113
  %v900 = vunpack.c.l.b16 %v114
  %v901 = vunpack.c.l.b16 %v115
  %v902 = vunpack.c.l.b16 %v116
  %v903 = vunpack.c.l.b16 %v117
  %v904 = vunpack.c.l.b16 %v118
  %v905 = vunpack.c.l.b16 %v119
  %v906 = vunpack.c.l.b16 %v120
  %v907 = vunpack.c.l.b16 %v121
  %v908 = vunpack.c.l.b16 %v122
  %v909 = vpack.c.b16 %v894, %v893
  %v910 = vpack.c.b16 %v896, %v895
  %v911 = vpack.c.b16 %v898, %v897
  %v912 = vpack.c.b16 %v900, %v899
  %v913 = vpack.c.b16 %v902, %v901
  %v914 = vpack.c.b16 %v904, %v903
  %v915 = vpack.c.b16 %v906, %v905
  %v916 = vpack.c.b16 %v908, %v907
  %925 = vmatpush.bf16.msra.mxu0 %v916
  %926 = vmatpush.bf16.msra.mxu0 %v915
  %927 = vmatpush.bf16.msra.mxu0 %v914
  %928 = vmatpush.bf16.msra.mxu0 %v913
  %929 = vmatpush.bf16.msra.mxu0 %v912
  %930 = vmatpush.bf16.msra.mxu0 %v911
  %931 = vmatpush.bf16.msra.mxu0 %v910
  %932 = vmatpush.bf16.msra.mxu0 %v909
  %933 = vmatmul.bf16.gmra.mxu0 %v875
  %v934 = vpop.f32.mrf.mxu0
  %v935 = vadd.f32 %v876, %v934
  %v936 = vpop.f32.mrf.mxu0
  %v937 = vadd.f32 %v876, %v936
  %938 = vdwg.mxu0
  %v939 = vmax.f32 %v935, 0.0
  %v940 = vmax.f32 %v937, 0.0
  %v941 = vpack.c.bf16 %v940, %v939
  %v942 = vperm.slane %v23, 4
  %v959 = vunpack.c.l.b16 %v124
  %v960 = vunpack.c.l.b16 %v125
  %v961 = vunpack.c.l.b16 %v126
  %v962 = vunpack.c.l.b16 %v127
  %v963 = vunpack.c.l.b16 %v128
  %v964 = vunpack.c.l.b16 %v129
  %v965 = vunpack.c.l.b16 %v130
  %v966 = vunpack.c.l.b16 %v131
  %v967 = vunpack.c.l.b16 %v132
  %v968 = vunpack.c.l.b16 %v133
  %v969 = vunpack.c.l.b16 %v134
  %v970 = vunpack.c.l.b16 %v135
  %v971 = vunpack.c.l.b16 %v136
  %v972 = vunpack.c.l.b16 %v137
  %v973 = vunpack.c.l.b16 %v138
  %v974 = vunpack.c.l.b16 %v139
  %v975 = vpack.c.b16 %v960, %v959
  %v976 = vpack.c.b16 %v962, %v961
  %v977 = vpack.c.b16 %v964, %v963
  %v978 = vpack.c.b16 %v966, %v965
  %v979 = vpack.c.b16 %v968, %v967
  %v980 = vpack.c.b16 %v970, %v969
  %v981 = vpack.c.b16 %v972, %v971
  %v982 = vpack.c.b16 %v974, %v973
  %991 = vmatpush.bf16.msra.mxu0 %v982
  %992 = vmatpush.bf16.msra.mxu0 %v981
  %993 = vmatpush.bf16.msra.mxu0 %v980
  %994 = vmatpush.bf16.msra.mxu0 %v979
  %995 = vmatpush.bf16.msra.mxu0 %v978
  %996 = vmatpush.bf16.msra.mxu0 %v977
  %997 = vmatpush.bf16.msra.mxu0 %v976
  %998 = vmatpush.bf16.msra.mxu0 %v975
  %999 = vmatmul.bf16.gmra.mxu0 %v941
  %v1000 = vpop.f32.mrf.mxu0
  %v1001 = vadd.f32 %v942, %v1000
  %v1002 = vpop.f32.mrf.mxu0
  %v1003 = vadd.f32 %v942, %v1002
  %1004 = vdwg.mxu0
  %v1005 = vpack.c.bf16 %v1001, %v1001
  %v1006 = vpack.c.bf16 %v1003, %v1003
  %v1007 = vpack.c.bf16 %v498, %v498
  %v1008 = vpack.c.bf16 %v499, %v499
  %v1009 = vpack.c.bf16 %v500, %v500
  %v1010 = vpack.c.bf16 %v501, %v501
  %v1013 = vunpack.c.l.b16 %v1007
  %v1014 = vunpack.c.l.b16 %v1008
  %v1015 = vpack.c.b16 %v1014, %v1013
  %1017 = vmatpush.bf16.xpose.msra.mxu0 0
  %1018 = vmatpush.bf16.xpose.msra.mxu0 0
  %1019 = vmatpush.bf16.xpose.msra.mxu0 0
  %1020 = vmatpush.bf16.xpose.msra.mxu0 0
  %1021 = vmatpush.bf16.xpose.msra.mxu0 0
  %1022 = vmatpush.bf16.xpose.msra.mxu0 0
  %1023 = vmatpush.bf16.xpose.msra.mxu0 0
  %1024 = vmatpush.bf16.xpose.msra.mxu0 %v1015
  %1025 = vmatmul.bf16.gmra.mxu0 %v1005
  %v1026 = vpop.f32.mrf.mxu0
  %v1027 = vadd.f32 0.0, %v1026
  %v1028 = vpop.f32.mrf.mxu0
  %1029 = vdwg.mxu0
  %v1032 = vunpack.c.l.b16 %v1009
  %v1033 = vunpack.c.l.b16 %v1010
  %v1034 = vpack.c.b16 %v1033, %v1032
  %1036 = vmatpush.bf16.xpose.msra.mxu0 0
  %1037 = vmatpush.bf16.xpose.msra.mxu0 0
  %1038 = vmatpush.bf16.xpose.msra.mxu0 0
  %1039 = vmatpush.bf16.xpose.msra.mxu0 0
  %1040 = vmatpush.bf16.xpose.msra.mxu0 0
  %1041 = vmatpush.bf16.xpose.msra.mxu0 0
  %1042 = vmatpush.bf16.xpose.msra.mxu0 0
  %1043 = vmatpush.bf16.xpose.msra.mxu0 %v1034
  %1044 = vmatmul.bf16.gmra.mxu0 %v1006
  %v1045 = vpop.f32.mrf.mxu0
  %v1046 = vadd.f32 0.0, %v1045
  %v1047 = vpop.f32.mrf.mxu0
  %1048 = vdwg.mxu0
  %v1049 = vpack.c.bf16 %v1027, %v1027
  %v1050 = vpack.c.bf16 %v1046, %v1046
  %v1053 = vunpack.c.l.b16 %v1049
  %v1054 = vunpack.c.l.b16 %v1050
  %v1055 = vrot.slane %v1053, 1
  %vm1056 = vcmask 1041409
  %v1057 = vsel %vm1056, %v1054, %v1055
  %v1058 = vpack.c.b16 %v1057, %v1057
  %v1061 = vunpack.c.l.b16 %v191
  %v1062 = vunpack.c.h.b16 %v191
  %v1063 = vunpack.c.l.b16 %v192
  %v1064 = vunpack.c.h.b16 %v192
  %v1065 = vpack.c.b16 %v1063, %v1061
  %v1066 = vpack.c.b16 %v1064, %v1062
  %v1070 = vsel %vm741, %v1058, 0
  %1072 = vmatpush.bf16.msra.mxu0 0
  %1073 = vmatpush.bf16.msra.mxu0 0
  %1074 = vmatpush.bf16.msra.mxu0 0
  %1075 = vmatpush.bf16.msra.mxu0 0
  %1076 = vmatpush.bf16.msra.mxu0 0
  %1077 = vmatpush.bf16.msra.mxu0 0
  %1078 = vmatpush.bf16.msra.mxu0 0
  %1079 = vmatpush.bf16.msra.mxu0 %v1065
  %1080 = vmatmul.bf16.gmra.mxu0 %v1070
  %v1081 = vpop.f32.mrf.mxu0
  %v1082 = vadd.f32 0.0, %v1081
  %v1083 = vpop.f32.mrf.mxu0
  %1084 = vdwg.mxu0
  %1085 = vmatpush.bf16.msra.mxu0 0
  %1086 = vmatpush.bf16.msra.mxu0 0
  %1087 = vmatpush.bf16.msra.mxu0 0
  %1088 = vmatpush.bf16.msra.mxu0 0
  %1089 = vmatpush.bf16.msra.mxu0 0
  %1090 = vmatpush.bf16.msra.mxu0 0
  %1091 = vmatpush.bf16.msra.mxu0 0
  %1092 = vmatpush.bf16.msra.mxu0 %v1066
  %1093 = vmatmul.bf16.gmra.mxu0 %v1070
  %v1094 = vpop.f32.mrf.mxu0
  %v1095 = vadd.f32 0.0, %v1094
  %v1096 = vpop.f32.mrf.mxu0
  %1097 = vdwg.mxu0
  %v1100 = vrot.slane %v1095, 6
  %vm1101 = vcmask 1041408
  %v1102 = vsel %vm1101, %v1082, %v1100
  %1104 = vst [vmem:[%s5] sm:$0xf] %v1102
  %v1105 = vperm.slane %v23, 5
  %v1122 = vunpack.c.l.b16 %v141
  %v1123 = vunpack.c.l.b16 %v142
  %v1124 = vunpack.c.l.b16 %v143
  %v1125 = vunpack.c.l.b16 %v144
  %v1126 = vunpack.c.l.b16 %v145
  %v1127 = vunpack.c.l.b16 %v146
  %v1128 = vunpack.c.l.b16 %v147
  %v1129 = vunpack.c.l.b16 %v148
  %v1130 = vunpack.c.l.b16 %v149
  %v1131 = vunpack.c.l.b16 %v150
  %v1132 = vunpack.c.l.b16 %v151
  %v1133 = vunpack.c.l.b16 %v152
  %v1134 = vunpack.c.l.b16 %v153
  %v1135 = vunpack.c.l.b16 %v154
  %v1136 = vunpack.c.l.b16 %v155
  %v1137 = vunpack.c.l.b16 %v156
  %v1138 = vpack.c.b16 %v1123, %v1122
  %v1139 = vpack.c.b16 %v1125, %v1124
  %v1140 = vpack.c.b16 %v1127, %v1126
  %v1141 = vpack.c.b16 %v1129, %v1128
  %v1142 = vpack.c.b16 %v1131, %v1130
  %v1143 = vpack.c.b16 %v1133, %v1132
  %v1144 = vpack.c.b16 %v1135, %v1134
  %v1145 = vpack.c.b16 %v1137, %v1136
  %1154 = vmatpush.bf16.msra.mxu0 %v1145
  %1155 = vmatpush.bf16.msra.mxu0 %v1144
  %1156 = vmatpush.bf16.msra.mxu0 %v1143
  %1157 = vmatpush.bf16.msra.mxu0 %v1142
  %1158 = vmatpush.bf16.msra.mxu0 %v1141
  %1159 = vmatpush.bf16.msra.mxu0 %v1140
  %1160 = vmatpush.bf16.msra.mxu0 %v1139
  %1161 = vmatpush.bf16.msra.mxu0 %v1138
  %1162 = vmatmul.bf16.gmra.mxu0 %v875
  %v1163 = vpop.f32.mrf.mxu0
  %v1164 = vadd.f32 %v1105, %v1163
  %v1165 = vpop.f32.mrf.mxu0
  %v1166 = vadd.f32 %v1105, %v1165
  %1167 = vdwg.mxu0
  %v1168 = vmax.f32 %v1164, 0.0
  %v1169 = vmax.f32 %v1166, 0.0
  %v1170 = vpack.c.bf16 %v1169, %v1168
  %v1171 = vperm.slane %v23, 6
  %v1188 = vunpack.c.l.b16 %v158
  %v1189 = vunpack.c.l.b16 %v159
  %v1190 = vunpack.c.l.b16 %v160
  %v1191 = vunpack.c.l.b16 %v161
  %v1192 = vunpack.c.l.b16 %v162
  %v1193 = vunpack.c.l.b16 %v163
  %v1194 = vunpack.c.l.b16 %v164
  %v1195 = vunpack.c.l.b16 %v165
  %v1196 = vunpack.c.l.b16 %v166
  %v1197 = vunpack.c.l.b16 %v167
  %v1198 = vunpack.c.l.b16 %v168
  %v1199 = vunpack.c.l.b16 %v169
  %v1200 = vunpack.c.l.b16 %v170
  %v1201 = vunpack.c.l.b16 %v171
  %v1202 = vunpack.c.l.b16 %v172
  %v1203 = vunpack.c.l.b16 %v173
  %v1204 = vpack.c.b16 %v1189, %v1188
  %v1205 = vpack.c.b16 %v1191, %v1190
  %v1206 = vpack.c.b16 %v1193, %v1192
  %v1207 = vpack.c.b16 %v1195, %v1194
  %v1208 = vpack.c.b16 %v1197, %v1196
  %v1209 = vpack.c.b16 %v1199, %v1198
  %v1210 = vpack.c.b16 %v1201, %v1200
  %v1211 = vpack.c.b16 %v1203, %v1202
  %1220 = vmatpush.bf16.msra.mxu0 %v1211
  %1221 = vmatpush.bf16.msra.mxu0 %v1210
  %1222 = vmatpush.bf16.msra.mxu0 %v1209
  %1223 = vmatpush.bf16.msra.mxu0 %v1208
  %1224 = vmatpush.bf16.msra.mxu0 %v1207
  %1225 = vmatpush.bf16.msra.mxu0 %v1206
  %1226 = vmatpush.bf16.msra.mxu0 %v1205
  %1227 = vmatpush.bf16.msra.mxu0 %v1204
  %1228 = vmatmul.bf16.gmra.mxu0 %v1170
  %v1229 = vpop.f32.mrf.mxu0
  %v1230 = vadd.f32 %v1171, %v1229
  %v1231 = vpop.f32.mrf.mxu0
  %v1232 = vadd.f32 %v1171, %v1231
  %1233 = vdwg.mxu0
  %v1236 = vrot.slane %v1232, 7
  %v1237 = vsel %vm1056, %v1236, %v1230
  %1239 = vst [vmem:[%s6] sm:$0x3] %v1237
  // Predicated region
  $region22: #{crohn_sam_forward.1} parent=0 // pred_check
    _
  $region23: #{crohn_sam_forward.1} parent=0 // pred_check_branch
    %1241 = sbr.rel (0) target = $region25
  $region24: #{crohn_sam_forward.1} parent=0 // pred_region
    _
  $region25: #{crohn_sam_forward.1} parent=0 // pred_fallthru
    _
  // Predicated region
  $region26: #{crohn_sam_forward.1} parent=0 // pred_check
    _
  $region27: #{crohn_sam_forward.1} parent=0 // pred_check_branch
    %1243 = sbr.rel (0) target = $region29
  $region28: #{crohn_sam_forward.1} parent=0 // pred_region
    _
  $region29: #{crohn_sam_forward.1} parent=0 // pred_fallthru
    _
  // Predicated region
  $region30: #{crohn_sam_forward.1} parent=0 // pred_check
    _
  $region31: #{crohn_sam_forward.1} parent=0 // pred_check_branch
    %1245 = sbr.rel (0) target = $region33
  $region32: #{crohn_sam_forward.1} parent=0 // pred_region
    _
  $region33: #{crohn_sam_forward.1} parent=0 // pred_fallthru
    _
  // Predicated region
  $region34: #{crohn_sam_forward.1} parent=0 // pred_check
    _
  $region35: #{crohn_sam_forward.1} parent=0 // pred_check_branch
    %1247 = sbr.rel (0) target = $region37
  $region36: #{crohn_sam_forward.1} parent=0 // pred_region
    _
  $region37: #{crohn_sam_forward.1} parent=0 // pred_fallthru
    _

</llo_original>
